<compile_context>
chip_gen: v5e
topology: v5e:2x2
jax: 0.10.0
libtpu: 0.0.40
codegen_flags: <defaults>
</compile_context>

<pallas_src>
import math
import functools

import jax
import jax.numpy as jnp
from jax.experimental import pallas as pl
from jax.experimental.pallas import tpu as pltpu

# ---- Small, deterministic hyperparameters consistent with the module __init__ ----
NTOKEN   = 16
NOUTPUTS = 4
D_MODEL  = 32
NHEAD    = 2
D_FFN    = 64
NLAYERS  = 2
SEQ      = 8
BATCH    = 2
MAX_PERIOD = 10000.0
OUT_PAD  = 128      # lane-dense decoder output width; wrapper slices back to NOUTPUTS


# ----------------------------- fused Pallas kernel ------------------------------------

def _layer_norm(x, gamma, beta, eps=1e-5):
    mu = jnp.mean(x, axis=-1, keepdims=True)
    var = jnp.mean((x - mu) ** 2, axis=-1, keepdims=True)
    return (x - mu) * jax.lax.rsqrt(var + eps) * gamma + beta


def fused_transformer_kernel(tok_ref, pe_ref, mask_ref, emb_ref,
                             wqkv_ref, bqkv_ref, wo_ref, bo_ref,
                             w1_ref, b1_ref, w2_ref, b2_ref,
                             g1_ref, be1_ref, g2_ref, be2_ref,
                             wdec_ref, o_ref, *, nlayers, nhead):
    """Whole forward pass for the full (flattened) batch in one invocation.

    tok_ref : (S*B, 1) int32 token ids (row = s*B + b)
    pe_ref  : (S*B, D) positional encoding rows
    mask_ref: (S*B, S*B) additive mask = causal AND same-batch (0 / -1e30)
    emb_ref : (ntoken, D) embedding table, pre-scaled by sqrt(d_model)
    Stacked per-layer weights carry a leading NLAYERS dim. Weights are stored
    (in_features, out_features) so y = x @ W + b.
    o_ref   : (S*B, OUT_PAD) sigmoid(decoder) output, columns >= NOUTPUTS are padding.
    """
    BS = tok_ref.shape[0]
    ntoken, D = emb_ref.shape
    dh = D // nhead

    # --- embedding lookup as a one-hot matmul (no gather) + positional encoding ---
    tok = tok_ref[...]                                              # (BS, 1) int32
    vocab = jax.lax.broadcasted_iota(jnp.int32, (BS, ntoken), 1)    # (BS, ntoken)
    onehot = (tok == vocab).astype(jnp.float32)
    x = jnp.dot(onehot, emb_ref[...], preferred_element_type=jnp.float32) + pe_ref[...]

    mask = mask_ref[...]                                            # (BS, BS)

    for l in range(nlayers):                                        # static unroll over layers
        # fused QKV projection; 1/sqrt(dh) is already folded into the Q columns of wqkv
        qkv = jnp.dot(x, wqkv_ref[l], preferred_element_type=jnp.float32) + bqkv_ref[l]
        q = qkv[:, :D]
        k = qkv[:, D:2 * D]
        v = qkv[:, 2 * D:]
        wo_l = wo_ref[l]                                            # (D, D)

        # static per-head loop; no concat: each head is accumulated through its Wo row-block
        attn = jnp.zeros_like(x)
        for h in range(nhead):
            sl = slice(h * dh, (h + 1) * dh)
            s = jnp.dot(q[:, sl], k[:, sl].T, preferred_element_type=jnp.float32) + mask
            m = jnp.max(s, axis=-1, keepdims=True)
            p = jnp.exp(s - m)
            p = p * pl.reciprocal(jnp.sum(p, axis=-1, keepdims=True), approx=True)
            hv = jnp.dot(p, v[:, sl], preferred_element_type=jnp.float32)          # (BS, dh)
            attn = attn + jnp.dot(hv, wo_l[sl, :], preferred_element_type=jnp.float32)

        # residual + LayerNorm 1 (post-norm)
        x = _layer_norm(x + attn + bo_ref[l], g1_ref[l], be1_ref[l])

        # feed-forward: relu(x @ W1 + b1) @ W2 + b2, residual + LayerNorm 2
        h1 = jnp.maximum(
            jnp.dot(x, w1_ref[l], preferred_element_type=jnp.float32) + b1_ref[l], 0.0)
        ff = jnp.dot(h1, w2_ref[l], preferred_element_type=jnp.float32) + b2_ref[l]
        x = _layer_norm(x + ff, g2_ref[l], be2_ref[l])

    # --- decoder (bias=False) + sigmoid; lane-dense (BS, 128) store ---
    y = jnp.dot(x, wdec_ref[...], preferred_element_type=jnp.float32)
    o_ref[...] = 1.0 / (1.0 + jnp.exp(-y))


def run_transformer(tok, params):
    """Single no-grid pallas_call; every operand is a whole-array VMEM block."""
    BS = tok.shape[0]
    kernel = functools.partial(fused_transformer_kernel, nlayers=NLAYERS, nhead=NHEAD)
    return pl.pallas_call(
        kernel,
        out_shape=jax.ShapeDtypeStruct((BS, OUT_PAD), jnp.float32),
    )(tok, params['pe_x'], params['mask'], params['emb'],
      params['wqkv'], params['bqkv'], params['wo'], params['bo'],
      params['w1'], params['b1'], params['w2'], params['b2'],
      params['g1'], params['be1'], params['g2'], params['be2'],
      params['wdec_pad'])


# ----------------------------- params + forward glue -------------------------------

def sinusoidal_pe(max_len, d_model, max_period=MAX_PERIOD):
    position = jnp.arange(max_len, dtype=jnp.float32)[:, None]
    div_term = jnp.exp(jnp.arange(0, d_model, 2, dtype=jnp.float32)
                       * (-math.log(max_period) / d_model))
    pe = jnp.zeros((max_len, d_model), dtype=jnp.float32)
    pe = pe.at[:, 0::2].set(jnp.sin(position * div_term))
    pe = pe.at[:, 1::2].set(jnp.cos(position * div_term))
    return pe


def _xavier_uniform(key, shape):
    fan_in, fan_out = shape
    lim = math.sqrt(6.0 / (fan_in + fan_out))
    return jax.random.uniform(key, shape, jnp.float32, -lim, lim)


def init_params(key, seq_len=SEQ, batch=BATCH):
    initrange = 0.1
    k_emb, k_dec, k_layers = jax.random.split(key, 3)
    emb = jax.random.uniform(k_emb, (NTOKEN, D_MODEL), jnp.float32, -initrange, initrange)
    dec_w = jax.random.uniform(k_dec, (D_MODEL, NOUTPUTS), jnp.float32, -initrange, initrange)

    wqkv, wo, w1, w2 = [], [], [], []
    for lk in jax.random.split(k_layers, NLAYERS):
        k0, k1, k2, k3 = jax.random.split(lk, 4)
        wqkv.append(_xavier_uniform(k0, (D_MODEL, 3 * D_MODEL)))
        wo.append(_xavier_uniform(k1, (D_MODEL, D_MODEL)))
        w1.append(_xavier_uniform(k2, (D_MODEL, D_FFN)))
        w2.append(_xavier_uniform(k3, (D_FFN, D_MODEL)))
    wqkv = jnp.stack(wqkv); wo = jnp.stack(wo); w1 = jnp.stack(w1); w2 = jnp.stack(w2)

    # one-time, semantics-preserving folds:
    dh = D_MODEL // NHEAD
    scale = 1.0 / math.sqrt(dh)
    wqkv = wqkv.at[:, :, :D_MODEL].multiply(scale)          # fold attention scale into Wq
    bqkv = jnp.zeros((NLAYERS, 1, 3 * D_MODEL), jnp.float32)  # (Q bias would be scaled too)

    params = dict(
        emb=emb * math.sqrt(D_MODEL),                       # fold sqrt(d_model) into embedding
        wqkv=wqkv, bqkv=bqkv,
        wo=wo, bo=jnp.zeros((NLAYERS, 1, D_MODEL), jnp.float32),
        w1=w1, b1=jnp.zeros((NLAYERS, 1, D_FFN), jnp.float32),
        w2=w2, b2=jnp.zeros((NLAYERS, 1, D_MODEL), jnp.float32),
        g1=jnp.ones((NLAYERS, 1, D_MODEL), jnp.float32),
        be1=jnp.zeros((NLAYERS, 1, D_MODEL), jnp.float32),
        g2=jnp.ones((NLAYERS, 1, D_MODEL), jnp.float32),
        be2=jnp.zeros((NLAYERS, 1, D_MODEL), jnp.float32),
        # decoder weight padded to a lane-dense 128-wide output; wrapper slices [:NOUTPUTS]
        wdec_pad=jnp.zeros((D_MODEL, OUT_PAD), jnp.float32).at[:, :NOUTPUTS].set(dec_w),
    )

    # static, data-independent kernel inputs precomputed once (PE rows + combined mask)
    BS = seq_len * batch
    pe = sinusoidal_pe(max(512, seq_len), D_MODEL)[:seq_len]           # (S, D)
    params['pe_x'] = jnp.repeat(pe, batch, axis=0)                     # row s*B + b -> pe[s]
    idx = jnp.arange(BS)
    s_idx, b_idx = idx // batch, idx % batch
    ok = (b_idx[:, None] == b_idx[None, :]) & (s_idx[None, :] <= s_idx[:, None])
    params['mask'] = jnp.where(ok, 0.0, -1e30).astype(jnp.float32)     # causal + batch block-diag
    return params


def transformer_forward(src_tokens, params):
    """src_tokens: (seq_len, batch) int32 token ids in [0, NTOKEN), like the PyTorch module."""
    S, B = src_tokens.shape
    tok = src_tokens.reshape(S * B, 1).astype(jnp.int32)   # seq-major rows: s*B + b
    out = run_transformer(tok, params)                     # (S*B, OUT_PAD)
    # PyTorch layout (seq, batch, noutputs); no transposes needed thanks to seq-major rows
    return out[:, :NOUTPUTS].reshape(S, B, NOUTPUTS)


if __name__ == "__main__":
    key = jax.random.PRNGKey(0)
    pkey, dkey = jax.random.split(key)
    params = init_params(pkey, seq_len=SEQ, batch=BATCH)
    src = jax.random.randint(dkey, (SEQ, BATCH), 0, NTOKEN, dtype=jnp.int32)

    out = transformer_forward(src, params)
    out = jax.block_until_ready(out)

    assert out.shape == (SEQ, BATCH, NOUTPUTS), out.shape
    assert bool(jnp.all(jnp.isfinite(out)))
    assert bool(jnp.all((out >= 0.0) & (out <= 1.0)))   # sigmoid range
    print("KERNEL_OK")
</pallas_src>

<mosaic_0001>
module attributes {stable_mosaic.version = 11 : i64} {
  func.func @fused_transformer_kernel(%arg0: memref<16x1xi32, #tpu.memory_space<vmem>>, %arg1: memref<16x32xf32, #tpu.memory_space<vmem>>, %arg2: memref<16x16xf32, #tpu.memory_space<vmem>>, %arg3: memref<16x32xf32, #tpu.memory_space<vmem>>, %arg4: memref<2x32x96xf32, #tpu.memory_space<vmem>>, %arg5: memref<2x1x96xf32, #tpu.memory_space<vmem>>, %arg6: memref<2x32x32xf32, #tpu.memory_space<vmem>>, %arg7: memref<2x1x32xf32, #tpu.memory_space<vmem>>, %arg8: memref<2x32x64xf32, #tpu.memory_space<vmem>>, %arg9: memref<2x1x64xf32, #tpu.memory_space<vmem>>, %arg10: memref<2x64x32xf32, #tpu.memory_space<vmem>>, %arg11: memref<2x1x32xf32, #tpu.memory_space<vmem>>, %arg12: memref<2x1x32xf32, #tpu.memory_space<vmem>>, %arg13: memref<2x1x32xf32, #tpu.memory_space<vmem>>, %arg14: memref<2x1x32xf32, #tpu.memory_space<vmem>>, %arg15: memref<2x1x32xf32, #tpu.memory_space<vmem>>, %arg16: memref<32x128xf32, #tpu.memory_space<vmem>>, %arg17: memref<16x128xf32, #tpu.memory_space<vmem>>) attributes {dimension_semantics = [], scalar_prefetch = 0 : i64, scratch_operands = 0 : i64, tpu.core_type = #tpu.core_type<tc>} {
    %c0 = arith.constant 0 : index
    %c0_0 = arith.constant 0 : index
    %0 = vector.load %arg0[%c0, %c0_0] : memref<16x1xi32, #tpu.memory_space<vmem>>, vector<16x1xi32>
    %1 = tpu.iota {dimensions = array<i32: 1>} : vector<16x16xi32>
    %2 = vector.broadcast %0 : vector<16x1xi32> to vector<16x16xi32>
    %3 = arith.cmpi eq, %2, %1 : vector<16x16xi32>
    %4 = arith.extui %3 : vector<16x16xi1> to vector<16x16xi32>
    %5 = arith.sitofp %4 : vector<16x16xi32> to vector<16x16xf32>
    %c0_1 = arith.constant 0 : index
    %c0_2 = arith.constant 0 : index
    %6 = vector.load %arg3[%c0_1, %c0_2] : memref<16x32xf32, #tpu.memory_space<vmem>>, vector<16x32xf32>
    %cst = arith.constant dense<0.000000e+00> : vector<16x32xf32>
    %7 = tpu.matmul %5, %6, %cst {dimension_numbers = #tpu.dot_dimension_numbers<[1], [0], [0], [1], [0, 0, 1, 1], [], []>} : vector<16x16xf32>, vector<16x32xf32>, vector<16x32xf32> -> vector<16x32xf32>
    %c0_3 = arith.constant 0 : index
    %c0_4 = arith.constant 0 : index
    %8 = vector.load %arg1[%c0_3, %c0_4] : memref<16x32xf32, #tpu.memory_space<vmem>>, vector<16x32xf32>
    %9 = arith.addf %7, %8 : vector<16x32xf32>
    %c0_5 = arith.constant 0 : index
    %c0_6 = arith.constant 0 : index
    %10 = vector.load %arg2[%c0_5, %c0_6] : memref<16x16xf32, #tpu.memory_space<vmem>>, vector<16x16xf32>
    %c0_7 = arith.constant 0 : index
    %c0_8 = arith.constant 0 : index
    %c0_9 = arith.constant 0 : index
    %11 = vector.load %arg4[%c0_7, %c0_8, %c0_9] : memref<2x32x96xf32, #tpu.memory_space<vmem>>, vector<1x32x96xf32>
    %12 = vector.shape_cast %11 : vector<1x32x96xf32> to vector<32x96xf32>
    %cst_10 = arith.constant dense<0.000000e+00> : vector<16x96xf32>
    %13 = tpu.matmul %9, %12, %cst_10 {dimension_numbers = #tpu.dot_dimension_numbers<[1], [0], [0], [1], [0, 0, 1, 1], [], []>} : vector<16x32xf32>, vector<32x96xf32>, vector<16x96xf32> -> vector<16x96xf32>
    %c0_11 = arith.constant 0 : index
    %c0_12 = arith.constant 0 : index
    %c0_13 = arith.constant 0 : index
    %14 = vector.load %arg5[%c0_11, %c0_12, %c0_13] : memref<2x1x96xf32, #tpu.memory_space<vmem>>, vector<1x1x96xf32>
    %15 = vector.shape_cast %14 : vector<1x1x96xf32> to vector<1x96xf32>
    %16 = vector.broadcast %15 : vector<1x96xf32> to vector<16x96xf32>
    %17 = arith.addf %13, %16 : vector<16x96xf32>
    %18 = vector.extract_strided_slice %17 {offsets = [0, 0], sizes = [16, 32], strides = [1, 1]} : vector<16x96xf32> to vector<16x32xf32>
    %19 = vector.extract_strided_slice %17 {offsets = [0, 32], sizes = [16, 32], strides = [1, 1]} : vector<16x96xf32> to vector<16x32xf32>
    %20 = vector.extract_strided_slice %17 {offsets = [0, 64], sizes = [16, 32], strides = [1, 1]} : vector<16x96xf32> to vector<16x32xf32>
    %c0_14 = arith.constant 0 : index
    %c0_15 = arith.constant 0 : index
    %c0_16 = arith.constant 0 : index
    %21 = vector.load %arg6[%c0_14, %c0_15, %c0_16] : memref<2x32x32xf32, #tpu.memory_space<vmem>>, vector<1x32x32xf32>
    %22 = vector.shape_cast %21 : vector<1x32x32xf32> to vector<32x32xf32>
    %cst_17 = arith.constant 0.000000e+00 : f32
    %23 = vector.broadcast %cst_17 : f32 to vector<16x32xf32>
    %24 = vector.extract_strided_slice %18 {offsets = [0, 0], sizes = [16, 16], strides = [1, 1]} : vector<16x32xf32> to vector<16x16xf32>
    %25 = vector.extract_strided_slice %19 {offsets = [0, 0], sizes = [16, 16], strides = [1, 1]} : vector<16x32xf32> to vector<16x16xf32>
    %26 = tpu.transpose %25, [1, 0] : vector<16x16xf32> -> vector<16x16xf32>
    %cst_18 = arith.constant dense<0.000000e+00> : vector<16x16xf32>
    %27 = tpu.matmul %24, %26, %cst_18 {dimension_numbers = #tpu.dot_dimension_numbers<[1], [0], [0], [1], [0, 0, 1, 1], [], []>} : vector<16x16xf32>, vector<16x16xf32>, vector<16x16xf32> -> vector<16x16xf32>
    %28 = arith.addf %27, %10 : vector<16x16xf32>
    %cst_19 = arith.constant dense<0xFF800000> : vector<16xf32>
    %29 = vector.multi_reduction <maximumf>, %28, %cst_19 [1] : vector<16x16xf32> to vector<16xf32>
    %30 = vector.shape_cast %29 : vector<16xf32> to vector<16x1xf32>
    %31 = vector.broadcast %30 : vector<16x1xf32> to vector<16x16xf32>
    %32 = arith.subf %28, %31 : vector<16x16xf32>
    %33 = math.exp %32 : vector<16x16xf32>
    %cst_20 = arith.constant dense<0.000000e+00> : vector<16xf32>
    %34 = vector.multi_reduction <add>, %33, %cst_20 [1] : vector<16x16xf32> to vector<16xf32>
    %35 = vector.shape_cast %34 : vector<16xf32> to vector<16x1xf32>
    %36 = tpu.reciprocal %35 {approx = true} : vector<16x1xf32> -> vector<16x1xf32>
    %37 = vector.broadcast %36 : vector<16x1xf32> to vector<16x16xf32>
    %38 = arith.mulf %33, %37 : vector<16x16xf32>
    %39 = vector.extract_strided_slice %20 {offsets = [0, 0], sizes = [16, 16], strides = [1, 1]} : vector<16x32xf32> to vector<16x16xf32>
    %cst_21 = arith.constant dense<0.000000e+00> : vector<16x16xf32>
    %40 = tpu.matmul %38, %39, %cst_21 {dimension_numbers = #tpu.dot_dimension_numbers<[1], [0], [0], [1], [0, 0, 1, 1], [], []>} : vector<16x16xf32>, vector<16x16xf32>, vector<16x16xf32> -> vector<16x16xf32>
    %41 = vector.extract_strided_slice %22 {offsets = [0, 0], sizes = [16, 32], strides = [1, 1]} : vector<32x32xf32> to vector<16x32xf32>
    %cst_22 = arith.constant dense<0.000000e+00> : vector<16x32xf32>
    %42 = tpu.matmul %40, %41, %cst_22 {dimension_numbers = #tpu.dot_dimension_numbers<[1], [0], [0], [1], [0, 0, 1, 1], [], []>} : vector<16x16xf32>, vector<16x32xf32>, vector<16x32xf32> -> vector<16x32xf32>
    %43 = arith.addf %23, %42 : vector<16x32xf32>
    %44 = vector.extract_strided_slice %18 {offsets = [0, 16], sizes = [16, 16], strides = [1, 1]} : vector<16x32xf32> to vector<16x16xf32>
    %45 = vector.extract_strided_slice %19 {offsets = [0, 16], sizes = [16, 16], strides = [1, 1]} : vector<16x32xf32> to vector<16x16xf32>
    %46 = tpu.transpose %45, [1, 0] : vector<16x16xf32> -> vector<16x16xf32>
    %cst_23 = arith.constant dense<0.000000e+00> : vector<16x16xf32>
    %47 = tpu.matmul %44, %46, %cst_23 {dimension_numbers = #tpu.dot_dimension_numbers<[1], [0], [0], [1], [0, 0, 1, 1], [], []>} : vector<16x16xf32>, vector<16x16xf32>, vector<16x16xf32> -> vector<16x16xf32>
    %48 = arith.addf %47, %10 : vector<16x16xf32>
    %cst_24 = arith.constant dense<0xFF800000> : vector<16xf32>
    %49 = vector.multi_reduction <maximumf>, %48, %cst_24 [1] : vector<16x16xf32> to vector<16xf32>
    %50 = vector.shape_cast %49 : vector<16xf32> to vector<16x1xf32>
    %51 = vector.broadcast %50 : vector<16x1xf32> to vector<16x16xf32>
    %52 = arith.subf %48, %51 : vector<16x16xf32>
    %53 = math.exp %52 : vector<16x16xf32>
    %cst_25 = arith.constant dense<0.000000e+00> : vector<16xf32>
    %54 = vector.multi_reduction <add>, %53, %cst_25 [1] : vector<16x16xf32> to vector<16xf32>
    %55 = vector.shape_cast %54 : vector<16xf32> to vector<16x1xf32>
    %56 = tpu.reciprocal %55 {approx = true} : vector<16x1xf32> -> vector<16x1xf32>
    %57 = vector.broadcast %56 : vector<16x1xf32> to vector<16x16xf32>
    %58 = arith.mulf %53, %57 : vector<16x16xf32>
    %59 = vector.extract_strided_slice %20 {offsets = [0, 16], sizes = [16, 16], strides = [1, 1]} : vector<16x32xf32> to vector<16x16xf32>
    %cst_26 = arith.constant dense<0.000000e+00> : vector<16x16xf32>
    %60 = tpu.matmul %58, %59, %cst_26 {dimension_numbers = #tpu.dot_dimension_numbers<[1], [0], [0], [1], [0, 0, 1, 1], [], []>} : vector<16x16xf32>, vector<16x16xf32>, vector<16x16xf32> -> vector<16x16xf32>
    %61 = vector.extract_strided_slice %22 {offsets = [16, 0], sizes = [16, 32], strides = [1, 1]} : vector<32x32xf32> to vector<16x32xf32>
    %cst_27 = arith.constant dense<0.000000e+00> : vector<16x32xf32>
    %62 = tpu.matmul %60, %61, %cst_27 {dimension_numbers = #tpu.dot_dimension_numbers<[1], [0], [0], [1], [0, 0, 1, 1], [], []>} : vector<16x16xf32>, vector<16x32xf32>, vector<16x32xf32> -> vector<16x32xf32>
    %63 = arith.addf %43, %62 : vector<16x32xf32>
    %64 = arith.addf %9, %63 : vector<16x32xf32>
    %c0_28 = arith.constant 0 : index
    %c0_29 = arith.constant 0 : index
    %c0_30 = arith.constant 0 : index
    %65 = vector.load %arg7[%c0_28, %c0_29, %c0_30] : memref<2x1x32xf32, #tpu.memory_space<vmem>>, vector<1x1x32xf32>
    %66 = vector.shape_cast %65 : vector<1x1x32xf32> to vector<1x32xf32>
    %67 = vector.broadcast %66 : vector<1x32xf32> to vector<16x32xf32>
    %68 = arith.addf %64, %67 : vector<16x32xf32>
    %c0_31 = arith.constant 0 : index
    %c0_32 = arith.constant 0 : index
    %c0_33 = arith.constant 0 : index
    %69 = vector.load %arg12[%c0_31, %c0_32, %c0_33] : memref<2x1x32xf32, #tpu.memory_space<vmem>>, vector<1x1x32xf32>
    %70 = vector.shape_cast %69 : vector<1x1x32xf32> to vector<1x32xf32>
    %c0_34 = arith.constant 0 : index
    %c0_35 = arith.constant 0 : index
    %c0_36 = arith.constant 0 : index
    %71 = vector.load %arg13[%c0_34, %c0_35, %c0_36] : memref<2x1x32xf32, #tpu.memory_space<vmem>>, vector<1x1x32xf32>
    %72 = vector.shape_cast %71 : vector<1x1x32xf32> to vector<1x32xf32>
    %cst_37 = arith.constant dense<0.000000e+00> : vector<16xf32>
    %73 = vector.multi_reduction <add>, %68, %cst_37 [1] : vector<16x32xf32> to vector<16xf32>
    %74 = vector.shape_cast %73 : vector<16xf32> to vector<16x1xf32>
    %cst_38 = arith.constant 3.200000e+01 : f32
    %75 = vector.broadcast %cst_38 : f32 to vector<16x1xf32>
    %76 = arith.divf %74, %75 : vector<16x1xf32>
    %77 = vector.broadcast %76 : vector<16x1xf32> to vector<16x32xf32>
    %78 = arith.subf %68, %77 : vector<16x32xf32>
    %79 = arith.mulf %78, %78 : vector<16x32xf32>
    %cst_39 = arith.constant dense<0.000000e+00> : vector<16xf32>
    %80 = vector.multi_reduction <add>, %79, %cst_39 [1] : vector<16x32xf32> to vector<16xf32>
    %81 = vector.shape_cast %80 : vector<16xf32> to vector<16x1xf32>
    %cst_40 = arith.constant 3.200000e+01 : f32
    %82 = vector.broadcast %cst_40 : f32 to vector<16x1xf32>
    %83 = arith.divf %81, %82 : vector<16x1xf32>
    %84 = vector.broadcast %76 : vector<16x1xf32> to vector<16x32xf32>
    %85 = arith.subf %68, %84 : vector<16x32xf32>
    %cst_41 = arith.constant 9.99999974E-6 : f32
    %86 = vector.broadcast %cst_41 : f32 to vector<16x1xf32>
    %87 = arith.addf %83, %86 : vector<16x1xf32>
    %88 = math.rsqrt %87 : vector<16x1xf32>
    %89 = vector.broadcast %88 : vector<16x1xf32> to vector<16x32xf32>
    %90 = arith.mulf %85, %89 : vector<16x32xf32>
    %91 = vector.broadcast %70 : vector<1x32xf32> to vector<16x32xf32>
    %92 = arith.mulf %90, %91 : vector<16x32xf32>
    %93 = vector.broadcast %72 : vector<1x32xf32> to vector<16x32xf32>
    %94 = arith.addf %92, %93 : vector<16x32xf32>
    %c0_42 = arith.constant 0 : index
    %c0_43 = arith.constant 0 : index
    %c0_44 = arith.constant 0 : index
    %95 = vector.load %arg8[%c0_42, %c0_43, %c0_44] : memref<2x32x64xf32, #tpu.memory_space<vmem>>, vector<1x32x64xf32>
    %96 = vector.shape_cast %95 : vector<1x32x64xf32> to vector<32x64xf32>
    %cst_45 = arith.constant dense<0.000000e+00> : vector<16x64xf32>
    %97 = tpu.matmul %94, %96, %cst_45 {dimension_numbers = #tpu.dot_dimension_numbers<[1], [0], [0], [1], [0, 0, 1, 1], [], []>} : vector<16x32xf32>, vector<32x64xf32>, vector<16x64xf32> -> vector<16x64xf32>
    %c0_46 = arith.constant 0 : index
    %c0_47 = arith.constant 0 : index
    %c0_48 = arith.constant 0 : index
    %98 = vector.load %arg9[%c0_46, %c0_47, %c0_48] : memref<2x1x64xf32, #tpu.memory_space<vmem>>, vector<1x1x64xf32>
    %99 = vector.shape_cast %98 : vector<1x1x64xf32> to vector<1x64xf32>
    %100 = vector.broadcast %99 : vector<1x64xf32> to vector<16x64xf32>
    %101 = arith.addf %97, %100 : vector<16x64xf32>
    %cst_49 = arith.constant 0.000000e+00 : f32
    %102 = vector.broadcast %cst_49 : f32 to vector<16x64xf32>
    %103 = arith.maximumf %101, %102 : vector<16x64xf32>
    %c0_50 = arith.constant 0 : index
    %c0_51 = arith.constant 0 : index
    %c0_52 = arith.constant 0 : index
    %104 = vector.load %arg10[%c0_50, %c0_51, %c0_52] : memref<2x64x32xf32, #tpu.memory_space<vmem>>, vector<1x64x32xf32>
    %105 = vector.shape_cast %104 : vector<1x64x32xf32> to vector<64x32xf32>
    %cst_53 = arith.constant dense<0.000000e+00> : vector<16x32xf32>
    %106 = tpu.matmul %103, %105, %cst_53 {dimension_numbers = #tpu.dot_dimension_numbers<[1], [0], [0], [1], [0, 0, 1, 1], [], []>} : vector<16x64xf32>, vector<64x32xf32>, vector<16x32xf32> -> vector<16x32xf32>
    %c0_54 = arith.constant 0 : index
    %c0_55 = arith.constant 0 : index
    %c0_56 = arith.constant 0 : index
    %107 = vector.load %arg11[%c0_54, %c0_55, %c0_56] : memref<2x1x32xf32, #tpu.memory_space<vmem>>, vector<1x1x32xf32>
    %108 = vector.shape_cast %107 : vector<1x1x32xf32> to vector<1x32xf32>
    %109 = vector.broadcast %108 : vector<1x32xf32> to vector<16x32xf32>
    %110 = arith.addf %106, %109 : vector<16x32xf32>
    %111 = arith.addf %94, %110 : vector<16x32xf32>
    %c0_57 = arith.constant 0 : index
    %c0_58 = arith.constant 0 : index
    %c0_59 = arith.constant 0 : index
    %112 = vector.load %arg14[%c0_57, %c0_58, %c0_59] : memref<2x1x32xf32, #tpu.memory_space<vmem>>, vector<1x1x32xf32>
    %113 = vector.shape_cast %112 : vector<1x1x32xf32> to vector<1x32xf32>
    %c0_60 = arith.constant 0 : index
    %c0_61 = arith.constant 0 : index
    %c0_62 = arith.constant 0 : index
    %114 = vector.load %arg15[%c0_60, %c0_61, %c0_62] : memref<2x1x32xf32, #tpu.memory_space<vmem>>, vector<1x1x32xf32>
    %115 = vector.shape_cast %114 : vector<1x1x32xf32> to vector<1x32xf32>
    %cst_63 = arith.constant dense<0.000000e+00> : vector<16xf32>
    %116 = vector.multi_reduction <add>, %111, %cst_63 [1] : vector<16x32xf32> to vector<16xf32>
    %117 = vector.shape_cast %116 : vector<16xf32> to vector<16x1xf32>
    %cst_64 = arith.constant 3.200000e+01 : f32
    %118 = vector.broadcast %cst_64 : f32 to vector<16x1xf32>
    %119 = arith.divf %117, %118 : vector<16x1xf32>
    %120 = vector.broadcast %119 : vector<16x1xf32> to vector<16x32xf32>
    %121 = arith.subf %111, %120 : vector<16x32xf32>
    %122 = arith.mulf %121, %121 : vector<16x32xf32>
    %cst_65 = arith.constant dense<0.000000e+00> : vector<16xf32>
    %123 = vector.multi_reduction <add>, %122, %cst_65 [1] : vector<16x32xf32> to vector<16xf32>
    %124 = vector.shape_cast %123 : vector<16xf32> to vector<16x1xf32>
    %cst_66 = arith.constant 3.200000e+01 : f32
    %125 = vector.broadcast %cst_66 : f32 to vector<16x1xf32>
    %126 = arith.divf %124, %125 : vector<16x1xf32>
    %127 = vector.broadcast %119 : vector<16x1xf32> to vector<16x32xf32>
    %128 = arith.subf %111, %127 : vector<16x32xf32>
    %cst_67 = arith.constant 9.99999974E-6 : f32
    %129 = vector.broadcast %cst_67 : f32 to vector<16x1xf32>
    %130 = arith.addf %126, %129 : vector<16x1xf32>
    %131 = math.rsqrt %130 : vector<16x1xf32>
    %132 = vector.broadcast %131 : vector<16x1xf32> to vector<16x32xf32>
    %133 = arith.mulf %128, %132 : vector<16x32xf32>
    %134 = vector.broadcast %113 : vector<1x32xf32> to vector<16x32xf32>
    %135 = arith.mulf %133, %134 : vector<16x32xf32>
    %136 = vector.broadcast %115 : vector<1x32xf32> to vector<16x32xf32>
    %137 = arith.addf %135, %136 : vector<16x32xf32>
    %c1 = arith.constant 1 : index
    %c0_68 = arith.constant 0 : index
    %c0_69 = arith.constant 0 : index
    %138 = vector.load %arg4[%c1, %c0_68, %c0_69] : memref<2x32x96xf32, #tpu.memory_space<vmem>>, vector<1x32x96xf32>
    %139 = vector.shape_cast %138 : vector<1x32x96xf32> to vector<32x96xf32>
    %cst_70 = arith.constant dense<0.000000e+00> : vector<16x96xf32>
    %140 = tpu.matmul %137, %139, %cst_70 {dimension_numbers = #tpu.dot_dimension_numbers<[1], [0], [0], [1], [0, 0, 1, 1], [], []>} : vector<16x32xf32>, vector<32x96xf32>, vector<16x96xf32> -> vector<16x96xf32>
    %c1_71 = arith.constant 1 : index
    %c0_72 = arith.constant 0 : index
    %c0_73 = arith.constant 0 : index
    %141 = vector.load %arg5[%c1_71, %c0_72, %c0_73] : memref<2x1x96xf32, #tpu.memory_space<vmem>>, vector<1x1x96xf32>
    %142 = vector.shape_cast %141 : vector<1x1x96xf32> to vector<1x96xf32>
    %143 = vector.broadcast %142 : vector<1x96xf32> to vector<16x96xf32>
    %144 = arith.addf %140, %143 : vector<16x96xf32>
    %145 = vector.extract_strided_slice %144 {offsets = [0, 0], sizes = [16, 32], strides = [1, 1]} : vector<16x96xf32> to vector<16x32xf32>
    %146 = vector.extract_strided_slice %144 {offsets = [0, 32], sizes = [16, 32], strides = [1, 1]} : vector<16x96xf32> to vector<16x32xf32>
    %147 = vector.extract_strided_slice %144 {offsets = [0, 64], sizes = [16, 32], strides = [1, 1]} : vector<16x96xf32> to vector<16x32xf32>
    %c1_74 = arith.constant 1 : index
    %c0_75 = arith.constant 0 : index
    %c0_76 = arith.constant 0 : index
    %148 = vector.load %arg6[%c1_74, %c0_75, %c0_76] : memref<2x32x32xf32, #tpu.memory_space<vmem>>, vector<1x32x32xf32>
    %149 = vector.shape_cast %148 : vector<1x32x32xf32> to vector<32x32xf32>
    %cst_77 = arith.constant 0.000000e+00 : f32
    %150 = vector.broadcast %cst_77 : f32 to vector<16x32xf32>
    %151 = vector.extract_strided_slice %145 {offsets = [0, 0], sizes = [16, 16], strides = [1, 1]} : vector<16x32xf32> to vector<16x16xf32>
    %152 = vector.extract_strided_slice %146 {offsets = [0, 0], sizes = [16, 16], strides = [1, 1]} : vector<16x32xf32> to vector<16x16xf32>
    %153 = tpu.transpose %152, [1, 0] : vector<16x16xf32> -> vector<16x16xf32>
    %cst_78 = arith.constant dense<0.000000e+00> : vector<16x16xf32>
    %154 = tpu.matmul %151, %153, %cst_78 {dimension_numbers = #tpu.dot_dimension_numbers<[1], [0], [0], [1], [0, 0, 1, 1], [], []>} : vector<16x16xf32>, vector<16x16xf32>, vector<16x16xf32> -> vector<16x16xf32>
    %155 = arith.addf %154, %10 : vector<16x16xf32>
    %cst_79 = arith.constant dense<0xFF800000> : vector<16xf32>
    %156 = vector.multi_reduction <maximumf>, %155, %cst_79 [1] : vector<16x16xf32> to vector<16xf32>
    %157 = vector.shape_cast %156 : vector<16xf32> to vector<16x1xf32>
    %158 = vector.broadcast %157 : vector<16x1xf32> to vector<16x16xf32>
    %159 = arith.subf %155, %158 : vector<16x16xf32>
    %160 = math.exp %159 : vector<16x16xf32>
    %cst_80 = arith.constant dense<0.000000e+00> : vector<16xf32>
    %161 = vector.multi_reduction <add>, %160, %cst_80 [1] : vector<16x16xf32> to vector<16xf32>
    %162 = vector.shape_cast %161 : vector<16xf32> to vector<16x1xf32>
    %163 = tpu.reciprocal %162 {approx = true} : vector<16x1xf32> -> vector<16x1xf32>
    %164 = vector.broadcast %163 : vector<16x1xf32> to vector<16x16xf32>
    %165 = arith.mulf %160, %164 : vector<16x16xf32>
    %166 = vector.extract_strided_slice %147 {offsets = [0, 0], sizes = [16, 16], strides = [1, 1]} : vector<16x32xf32> to vector<16x16xf32>
    %cst_81 = arith.constant dense<0.000000e+00> : vector<16x16xf32>
    %167 = tpu.matmul %165, %166, %cst_81 {dimension_numbers = #tpu.dot_dimension_numbers<[1], [0], [0], [1], [0, 0, 1, 1], [], []>} : vector<16x16xf32>, vector<16x16xf32>, vector<16x16xf32> -> vector<16x16xf32>
    %168 = vector.extract_strided_slice %149 {offsets = [0, 0], sizes = [16, 32], strides = [1, 1]} : vector<32x32xf32> to vector<16x32xf32>
    %cst_82 = arith.constant dense<0.000000e+00> : vector<16x32xf32>
    %169 = tpu.matmul %167, %168, %cst_82 {dimension_numbers = #tpu.dot_dimension_numbers<[1], [0], [0], [1], [0, 0, 1, 1], [], []>} : vector<16x16xf32>, vector<16x32xf32>, vector<16x32xf32> -> vector<16x32xf32>
    %170 = arith.addf %150, %169 : vector<16x32xf32>
    %171 = vector.extract_strided_slice %145 {offsets = [0, 16], sizes = [16, 16], strides = [1, 1]} : vector<16x32xf32> to vector<16x16xf32>
    %172 = vector.extract_strided_slice %146 {offsets = [0, 16], sizes = [16, 16], strides = [1, 1]} : vector<16x32xf32> to vector<16x16xf32>
    %173 = tpu.transpose %172, [1, 0] : vector<16x16xf32> -> vector<16x16xf32>
    %cst_83 = arith.constant dense<0.000000e+00> : vector<16x16xf32>
    %174 = tpu.matmul %171, %173, %cst_83 {dimension_numbers = #tpu.dot_dimension_numbers<[1], [0], [0], [1], [0, 0, 1, 1], [], []>} : vector<16x16xf32>, vector<16x16xf32>, vector<16x16xf32> -> vector<16x16xf32>
    %175 = arith.addf %174, %10 : vector<16x16xf32>
    %cst_84 = arith.constant dense<0xFF800000> : vector<16xf32>
    %176 = vector.multi_reduction <maximumf>, %175, %cst_84 [1] : vector<16x16xf32> to vector<16xf32>
    %177 = vector.shape_cast %176 : vector<16xf32> to vector<16x1xf32>
    %178 = vector.broadcast %177 : vector<16x1xf32> to vector<16x16xf32>
    %179 = arith.subf %175, %178 : vector<16x16xf32>
    %180 = math.exp %179 : vector<16x16xf32>
    %cst_85 = arith.constant dense<0.000000e+00> : vector<16xf32>
    %181 = vector.multi_reduction <add>, %180, %cst_85 [1] : vector<16x16xf32> to vector<16xf32>
    %182 = vector.shape_cast %181 : vector<16xf32> to vector<16x1xf32>
    %183 = tpu.reciprocal %182 {approx = true} : vector<16x1xf32> -> vector<16x1xf32>
    %184 = vector.broadcast %183 : vector<16x1xf32> to vector<16x16xf32>
    %185 = arith.mulf %180, %184 : vector<16x16xf32>
    %186 = vector.extract_strided_slice %147 {offsets = [0, 16], sizes = [16, 16], strides = [1, 1]} : vector<16x32xf32> to vector<16x16xf32>
    %cst_86 = arith.constant dense<0.000000e+00> : vector<16x16xf32>
    %187 = tpu.matmul %185, %186, %cst_86 {dimension_numbers = #tpu.dot_dimension_numbers<[1], [0], [0], [1], [0, 0, 1, 1], [], []>} : vector<16x16xf32>, vector<16x16xf32>, vector<16x16xf32> -> vector<16x16xf32>
    %188 = vector.extract_strided_slice %149 {offsets = [16, 0], sizes = [16, 32], strides = [1, 1]} : vector<32x32xf32> to vector<16x32xf32>
    %cst_87 = arith.constant dense<0.000000e+00> : vector<16x32xf32>
    %189 = tpu.matmul %187, %188, %cst_87 {dimension_numbers = #tpu.dot_dimension_numbers<[1], [0], [0], [1], [0, 0, 1, 1], [], []>} : vector<16x16xf32>, vector<16x32xf32>, vector<16x32xf32> -> vector<16x32xf32>
    %190 = arith.addf %170, %189 : vector<16x32xf32>
    %191 = arith.addf %137, %190 : vector<16x32xf32>
    %c1_88 = arith.constant 1 : index
    %c0_89 = arith.constant 0 : index
    %c0_90 = arith.constant 0 : index
    %192 = vector.load %arg7[%c1_88, %c0_89, %c0_90] : memref<2x1x32xf32, #tpu.memory_space<vmem>>, vector<1x1x32xf32>
    %193 = vector.shape_cast %192 : vector<1x1x32xf32> to vector<1x32xf32>
    %194 = vector.broadcast %193 : vector<1x32xf32> to vector<16x32xf32>
    %195 = arith.addf %191, %194 : vector<16x32xf32>
    %c1_91 = arith.constant 1 : index
    %c0_92 = arith.constant 0 : index
    %c0_93 = arith.constant 0 : index
    %196 = vector.load %arg12[%c1_91, %c0_92, %c0_93] : memref<2x1x32xf32, #tpu.memory_space<vmem>>, vector<1x1x32xf32>
    %197 = vector.shape_cast %196 : vector<1x1x32xf32> to vector<1x32xf32>
    %c1_94 = arith.constant 1 : index
    %c0_95 = arith.constant 0 : index
    %c0_96 = arith.constant 0 : index
    %198 = vector.load %arg13[%c1_94, %c0_95, %c0_96] : memref<2x1x32xf32, #tpu.memory_space<vmem>>, vector<1x1x32xf32>
    %199 = vector.shape_cast %198 : vector<1x1x32xf32> to vector<1x32xf32>
    %cst_97 = arith.constant dense<0.000000e+00> : vector<16xf32>
    %200 = vector.multi_reduction <add>, %195, %cst_97 [1] : vector<16x32xf32> to vector<16xf32>
    %201 = vector.shape_cast %200 : vector<16xf32> to vector<16x1xf32>
    %cst_98 = arith.constant 3.200000e+01 : f32
    %202 = vector.broadcast %cst_98 : f32 to vector<16x1xf32>
    %203 = arith.divf %201, %202 : vector<16x1xf32>
    %204 = vector.broadcast %203 : vector<16x1xf32> to vector<16x32xf32>
    %205 = arith.subf %195, %204 : vector<16x32xf32>
    %206 = arith.mulf %205, %205 : vector<16x32xf32>
    %cst_99 = arith.constant dense<0.000000e+00> : vector<16xf32>
    %207 = vector.multi_reduction <add>, %206, %cst_99 [1] : vector<16x32xf32> to vector<16xf32>
    %208 = vector.shape_cast %207 : vector<16xf32> to vector<16x1xf32>
    %cst_100 = arith.constant 3.200000e+01 : f32
    %209 = vector.broadcast %cst_100 : f32 to vector<16x1xf32>
    %210 = arith.divf %208, %209 : vector<16x1xf32>
    %211 = vector.broadcast %203 : vector<16x1xf32> to vector<16x32xf32>
    %212 = arith.subf %195, %211 : vector<16x32xf32>
    %cst_101 = arith.constant 9.99999974E-6 : f32
    %213 = vector.broadcast %cst_101 : f32 to vector<16x1xf32>
    %214 = arith.addf %210, %213 : vector<16x1xf32>
    %215 = math.rsqrt %214 : vector<16x1xf32>
    %216 = vector.broadcast %215 : vector<16x1xf32> to vector<16x32xf32>
    %217 = arith.mulf %212, %216 : vector<16x32xf32>
    %218 = vector.broadcast %197 : vector<1x32xf32> to vector<16x32xf32>
    %219 = arith.mulf %217, %218 : vector<16x32xf32>
    %220 = vector.broadcast %199 : vector<1x32xf32> to vector<16x32xf32>
    %221 = arith.addf %219, %220 : vector<16x32xf32>
    %c1_102 = arith.constant 1 : index
    %c0_103 = arith.constant 0 : index
    %c0_104 = arith.constant 0 : index
    %222 = vector.load %arg8[%c1_102, %c0_103, %c0_104] : memref<2x32x64xf32, #tpu.memory_space<vmem>>, vector<1x32x64xf32>
    %223 = vector.shape_cast %222 : vector<1x32x64xf32> to vector<32x64xf32>
    %cst_105 = arith.constant dense<0.000000e+00> : vector<16x64xf32>
    %224 = tpu.matmul %221, %223, %cst_105 {dimension_numbers = #tpu.dot_dimension_numbers<[1], [0], [0], [1], [0, 0, 1, 1], [], []>} : vector<16x32xf32>, vector<32x64xf32>, vector<16x64xf32> -> vector<16x64xf32>
    %c1_106 = arith.constant 1 : index
    %c0_107 = arith.constant 0 : index
    %c0_108 = arith.constant 0 : index
    %225 = vector.load %arg9[%c1_106, %c0_107, %c0_108] : memref<2x1x64xf32, #tpu.memory_space<vmem>>, vector<1x1x64xf32>
    %226 = vector.shape_cast %225 : vector<1x1x64xf32> to vector<1x64xf32>
    %227 = vector.broadcast %226 : vector<1x64xf32> to vector<16x64xf32>
    %228 = arith.addf %224, %227 : vector<16x64xf32>
    %cst_109 = arith.constant 0.000000e+00 : f32
    %229 = vector.broadcast %cst_109 : f32 to vector<16x64xf32>
    %230 = arith.maximumf %228, %229 : vector<16x64xf32>
    %c1_110 = arith.constant 1 : index
    %c0_111 = arith.constant 0 : index
    %c0_112 = arith.constant 0 : index
    %231 = vector.load %arg10[%c1_110, %c0_111, %c0_112] : memref<2x64x32xf32, #tpu.memory_space<vmem>>, vector<1x64x32xf32>
    %232 = vector.shape_cast %231 : vector<1x64x32xf32> to vector<64x32xf32>
    %cst_113 = arith.constant dense<0.000000e+00> : vector<16x32xf32>
    %233 = tpu.matmul %230, %232, %cst_113 {dimension_numbers = #tpu.dot_dimension_numbers<[1], [0], [0], [1], [0, 0, 1, 1], [], []>} : vector<16x64xf32>, vector<64x32xf32>, vector<16x32xf32> -> vector<16x32xf32>
    %c1_114 = arith.constant 1 : index
    %c0_115 = arith.constant 0 : index
    %c0_116 = arith.constant 0 : index
    %234 = vector.load %arg11[%c1_114, %c0_115, %c0_116] : memref<2x1x32xf32, #tpu.memory_space<vmem>>, vector<1x1x32xf32>
    %235 = vector.shape_cast %234 : vector<1x1x32xf32> to vector<1x32xf32>
    %236 = vector.broadcast %235 : vector<1x32xf32> to vector<16x32xf32>
    %237 = arith.addf %233, %236 : vector<16x32xf32>
    %238 = arith.addf %221, %237 : vector<16x32xf32>
    %c1_117 = arith.constant 1 : index
    %c0_118 = arith.constant 0 : index
    %c0_119 = arith.constant 0 : index
    %239 = vector.load %arg14[%c1_117, %c0_118, %c0_119] : memref<2x1x32xf32, #tpu.memory_space<vmem>>, vector<1x1x32xf32>
    %240 = vector.shape_cast %239 : vector<1x1x32xf32> to vector<1x32xf32>
    %c1_120 = arith.constant 1 : index
    %c0_121 = arith.constant 0 : index
    %c0_122 = arith.constant 0 : index
    %241 = vector.load %arg15[%c1_120, %c0_121, %c0_122] : memref<2x1x32xf32, #tpu.memory_space<vmem>>, vector<1x1x32xf32>
    %242 = vector.shape_cast %241 : vector<1x1x32xf32> to vector<1x32xf32>
    %cst_123 = arith.constant dense<0.000000e+00> : vector<16xf32>
    %243 = vector.multi_reduction <add>, %238, %cst_123 [1] : vector<16x32xf32> to vector<16xf32>
    %244 = vector.shape_cast %243 : vector<16xf32> to vector<16x1xf32>
    %cst_124 = arith.constant 3.200000e+01 : f32
    %245 = vector.broadcast %cst_124 : f32 to vector<16x1xf32>
    %246 = arith.divf %244, %245 : vector<16x1xf32>
    %247 = vector.broadcast %246 : vector<16x1xf32> to vector<16x32xf32>
    %248 = arith.subf %238, %247 : vector<16x32xf32>
    %249 = arith.mulf %248, %248 : vector<16x32xf32>
    %cst_125 = arith.constant dense<0.000000e+00> : vector<16xf32>
    %250 = vector.multi_reduction <add>, %249, %cst_125 [1] : vector<16x32xf32> to vector<16xf32>
    %251 = vector.shape_cast %250 : vector<16xf32> to vector<16x1xf32>
    %cst_126 = arith.constant 3.200000e+01 : f32
    %252 = vector.broadcast %cst_126 : f32 to vector<16x1xf32>
    %253 = arith.divf %251, %252 : vector<16x1xf32>
    %254 = vector.broadcast %246 : vector<16x1xf32> to vector<16x32xf32>
    %255 = arith.subf %238, %254 : vector<16x32xf32>
    %cst_127 = arith.constant 9.99999974E-6 : f32
    %256 = vector.broadcast %cst_127 : f32 to vector<16x1xf32>
    %257 = arith.addf %253, %256 : vector<16x1xf32>
    %258 = math.rsqrt %257 : vector<16x1xf32>
    %259 = vector.broadcast %258 : vector<16x1xf32> to vector<16x32xf32>
    %260 = arith.mulf %255, %259 : vector<16x32xf32>
    %261 = vector.broadcast %240 : vector<1x32xf32> to vector<16x32xf32>
    %262 = arith.mulf %260, %261 : vector<16x32xf32>
    %263 = vector.broadcast %242 : vector<1x32xf32> to vector<16x32xf32>
    %264 = arith.addf %262, %263 : vector<16x32xf32>
    %c0_128 = arith.constant 0 : index
    %c0_129 = arith.constant 0 : index
    %265 = vector.load %arg16[%c0_128, %c0_129] : memref<32x128xf32, #tpu.memory_space<vmem>>, vector<32x128xf32>
    %cst_130 = arith.constant dense<0.000000e+00> : vector<16x128xf32>
    %266 = tpu.matmul %264, %265, %cst_130 {dimension_numbers = #tpu.dot_dimension_numbers<[1], [0], [0], [1], [0, 0, 1, 1], [], []>} : vector<16x32xf32>, vector<32x128xf32>, vector<16x128xf32> -> vector<16x128xf32>
    %cst_131 = arith.constant 0.000000e+00 : f32
    %267 = vector.broadcast %cst_131 : f32 to vector<16x128xf32>
    %268 = arith.subf %267, %266 : vector<16x128xf32>
    %269 = math.exp %268 : vector<16x128xf32>
    %cst_132 = arith.constant 1.000000e+00 : f32
    %270 = vector.broadcast %cst_132 : f32 to vector<16x128xf32>
    %271 = arith.addf %270, %269 : vector<16x128xf32>
    %cst_133 = arith.constant 1.000000e+00 : f32
    %272 = vector.broadcast %cst_133 : f32 to vector<16x128xf32>
    %273 = arith.divf %272, %271 : vector<16x128xf32>
    %c0_134 = arith.constant 0 : index
    %c0_135 = arith.constant 0 : index
    %274 = vector.load %arg17[%c0_134, %c0_135] : memref<16x128xf32, #tpu.memory_space<vmem>>, vector<16x128xf32>
    tpu.vector_store %arg17[%c0_134, %c0_135], %273 {strides = array<i32>} : memref<16x128xf32, #tpu.memory_space<vmem>>, vector<16x128xf32>,
    return
  }
}

</mosaic_0001>

<llo_original>
// kernel: tpu_custom_call.1
$region0: #{tpu_custom_call.1}
  #allocation0 [shape = 'u32[]', space=smem, size = 0x4, offset = 0x4, fixed_abs, tag = 'smem constant byte address 0x4 - core index']
  #allocation1 [shape = 'u32[72,128]{1,0:T(1,128)}', space=vmem, size = 0x9000, scoped, tag = 'internal scratch']
  %s0 = inlined_call_operand.vmem [shape: s32[16,1], index: 0, kind: input, shape index: {}]
  %s1 = inlined_call_operand.vmem [shape: f32[16,32], index: 1, kind: input, shape index: {}]
  %s2 = inlined_call_operand.hbm [shape: f32[16,16], index: 2, kind: input, shape index: {}]
  %s3 = inlined_call_operand.hbm [shape: f32[16,32], index: 3, kind: input, shape index: {}]
  %s4 = inlined_call_operand.vmem [shape: f32[2,32,96], index: 4, kind: input, shape index: {}]
  %s5 = inlined_call_operand.vmem [shape: f32[2,1,96], index: 5, kind: input, shape index: {}]
  %s6 = inlined_call_operand.vmem [shape: f32[2,32,32], index: 6, kind: input, shape index: {}]
  %s7 = inlined_call_operand.vmem [shape: f32[2,1,32], index: 7, kind: input, shape index: {}]
  %s8 = inlined_call_operand.vmem [shape: f32[2,32,64], index: 8, kind: input, shape index: {}]
  %s9 = inlined_call_operand.vmem [shape: f32[2,1,64], index: 9, kind: input, shape index: {}]
  %s10 = inlined_call_operand.vmem [shape: f32[2,64,32], index: 10, kind: input, shape index: {}]
  %s11 = inlined_call_operand.vmem [shape: f32[2,1,32], index: 11, kind: input, shape index: {}]
  %s12 = inlined_call_operand.vmem [shape: f32[2,1,32], index: 12, kind: input, shape index: {}]
  %s13 = inlined_call_operand.vmem [shape: f32[2,1,32], index: 13, kind: input, shape index: {}]
  %s14 = inlined_call_operand.hbm [shape: f32[2,1,32], index: 14, kind: input, shape index: {}]
  %s15 = inlined_call_operand.vmem [shape: f32[2,1,32], index: 15, kind: input, shape index: {}]
  %s16 = inlined_call_operand.hbm [shape: f32[32,128], index: 16, kind: input, shape index: {}]
  %s17 = inlined_call_operand.hbm [shape: f32[16,128], index: 17, kind: output, shape index: {}]
  %s18 = sld [smem:[#allocation0]]
  $region94: #{tpu_custom_call.1} parent=0
    _
  %s20 = ssub.s32 1, %s18
  %s21 = scalar_select 0, %s20, %s18
  $region1: #{tpu_custom_call.1} parent=0
    #allocation2 [shape = 'u8[8192]{0}', space=vmem, size = 0x2000, scoped, tag = 'input window, operand 2, single buffered']
    #allocation3 [shape = 's32[1]{0}', space=sflag, size = 0x4, scoped, tag = 'scoped memory for tpu_custom_call.1']
    #allocation4 [shape = 's32[1]{0}', space=sflag, size = 0x4, scoped, tag = 'scoped memory for tpu_custom_call.1']
    #allocation5 [shape = 'u8[8192]{0}', space=vmem, size = 0x2000, scoped, tag = 'input window, operand 3, single buffered']
    #allocation6 [shape = 's32[1]{0}', space=sflag, size = 0x4, scoped, tag = 'scoped memory for tpu_custom_call.1']
    #allocation7 [shape = 'u8[1024]{0}', space=vmem, size = 0x400, scoped, tag = 'input window, operand 14, single buffered']
    #allocation8 [shape = 'u8[16384]{0}', space=vmem, size = 0x4000, scoped, tag = 'input window, operand 16, single buffered']
    #allocation9 [shape = 's32[1]{0}', space=sflag, size = 0x4, scoped, tag = 'scoped memory for tpu_custom_call.1']
    #allocation10 [shape = 'u8[8192]{0}', space=vmem, size = 0x2000, scoped, tag = 'output window, operand 0, single buffered']
    %22 = vsyncpa [#allocation3], 0
    %23 = vsyncpa [#allocation6], 0
    %24 = vsyncpa [#allocation9], 0
    %25 = vsyncpa [#allocation4], 0
    // Predicated region
    $region2: #{tpu_custom_call.1} parent=1 // pred_check
      _
    $region3: #{tpu_custom_call.1} parent=1 // pred_check_branch
      %27 = sbr.rel (0) target = $region5
    $region4: #{tpu_custom_call.1} parent=1 // pred_region
      _
    $region5: #{tpu_custom_call.1} parent=1 // pred_fallthru
      _
    // Predicated region
    $region6: #{tpu_custom_call.1} parent=1 // pred_check
      _
    $region7: #{tpu_custom_call.1} parent=1 // pred_check_branch
      %29 = sbr.rel (0) target = $region9
    $region8: #{tpu_custom_call.1} parent=1 // pred_region
      _
    $region9: #{tpu_custom_call.1} parent=1 // pred_fallthru
      _
    // Predicated region
    $region10: #{tpu_custom_call.1} parent=1 // pred_check
      _
    $region11: #{tpu_custom_call.1} parent=1 // pred_check_branch
      %31 = sbr.rel (0) target = $region13
    $region12: #{tpu_custom_call.1} parent=1 // pred_region
      %33 = vsyncadd [#allocation3], 0
      %s34 = sshll.u32 %s2, 4
      %s35 = int_to_ptr.hbm [resolvable:$true] %s34
      %s36 = sshll.u32 [#allocation2], 4
      %s37 = int_to_ptr.vmem [resolvable:$true] %s36
      %42 = dma.hbm_to_vmem [thread:$0]  %s35, 256, %s37, [#allocation3], 128, 128, 8
    $region13: #{tpu_custom_call.1} parent=1 // pred_fallthru
      _
    // Predicated region
    $region14: #{tpu_custom_call.1} parent=1 // pred_check
      _
    $region15: #{tpu_custom_call.1} parent=1 // pred_check_branch
      %44 = sbr.rel (0) target = $region17
    $region16: #{tpu_custom_call.1} parent=1 // pred_region
      %46 = vsyncadd [#allocation6], 0
      %s47 = sshll.u32 %s3, 4
      %s48 = int_to_ptr.hbm [resolvable:$true] %s47
      %s49 = sshll.u32 [#allocation5], 4
      %s50 = int_to_ptr.vmem [resolvable:$true] %s49
      %55 = dma.hbm_to_vmem [thread:$0]  %s48, 256, %s50, [#allocation6], 128, 128, 8
    $region17: #{tpu_custom_call.1} parent=1 // pred_fallthru
      _
    // Predicated region
    $region18: #{tpu_custom_call.1} parent=1 // pred_check
      _
    $region19: #{tpu_custom_call.1} parent=1 // pred_check_branch
      %57 = sbr.rel (0) target = $region21
    $region20: #{tpu_custom_call.1} parent=1 // pred_region
      _
    $region21: #{tpu_custom_call.1} parent=1 // pred_fallthru
      _
    // Predicated region
    $region22: #{tpu_custom_call.1} parent=1 // pred_check
      _
    $region23: #{tpu_custom_call.1} parent=1 // pred_check_branch
      %59 = sbr.rel (0) target = $region25
    $region24: #{tpu_custom_call.1} parent=1 // pred_region
      _
    $region25: #{tpu_custom_call.1} parent=1 // pred_fallthru
      _
    // Predicated region
    $region26: #{tpu_custom_call.1} parent=1 // pred_check
      _
    $region27: #{tpu_custom_call.1} parent=1 // pred_check_branch
      %61 = sbr.rel (0) target = $region29
    $region28: #{tpu_custom_call.1} parent=1 // pred_region
      _
    $region29: #{tpu_custom_call.1} parent=1 // pred_fallthru
      _
    // Predicated region
    $region30: #{tpu_custom_call.1} parent=1 // pred_check
      _
    $region31: #{tpu_custom_call.1} parent=1 // pred_check_branch
      %63 = sbr.rel (0) target = $region33
    $region32: #{tpu_custom_call.1} parent=1 // pred_region
      _
    $region33: #{tpu_custom_call.1} parent=1 // pred_fallthru
      _
    // Predicated region
    $region34: #{tpu_custom_call.1} parent=1 // pred_check
      _
    $region35: #{tpu_custom_call.1} parent=1 // pred_check_branch
      %65 = sbr.rel (0) target = $region37
    $region36: #{tpu_custom_call.1} parent=1 // pred_region
      _
    $region37: #{tpu_custom_call.1} parent=1 // pred_fallthru
      _
    // Predicated region
    $region38: #{tpu_custom_call.1} parent=1 // pred_check
      _
    $region39: #{tpu_custom_call.1} parent=1 // pred_check_branch
      %67 = sbr.rel (0) target = $region41
    $region40: #{tpu_custom_call.1} parent=1 // pred_region
      _
    $region41: #{tpu_custom_call.1} parent=1 // pred_fallthru
      _
    // Predicated region
    $region42: #{tpu_custom_call.1} parent=1 // pred_check
      _
    $region43: #{tpu_custom_call.1} parent=1 // pred_check_branch
      %69 = sbr.rel (0) target = $region45
    $region44: #{tpu_custom_call.1} parent=1 // pred_region
      _
    $region45: #{tpu_custom_call.1} parent=1 // pred_fallthru
      _
    // Predicated region
    $region46: #{tpu_custom_call.1} parent=1 // pred_check
      _
    $region47: #{tpu_custom_call.1} parent=1 // pred_check_branch
      %71 = sbr.rel (0) target = $region49
    $region48: #{tpu_custom_call.1} parent=1 // pred_region
      _
    $region49: #{tpu_custom_call.1} parent=1 // pred_fallthru
      _
    // Predicated region
    $region50: #{tpu_custom_call.1} parent=1 // pred_check
      _
    $region51: #{tpu_custom_call.1} parent=1 // pred_check_branch
      %73 = sbr.rel (0) target = $region53
    $region52: #{tpu_custom_call.1} parent=1 // pred_region
      _
    $region53: #{tpu_custom_call.1} parent=1 // pred_fallthru
      _
    // Predicated region
    $region54: #{tpu_custom_call.1} parent=1 // pred_check
      _
    $region55: #{tpu_custom_call.1} parent=1 // pred_check_branch
      %75 = sbr.rel (0) target = $region57
    $region56: #{tpu_custom_call.1} parent=1 // pred_region
      _
    $region57: #{tpu_custom_call.1} parent=1 // pred_fallthru
      _
    // Predicated region
    $region58: #{tpu_custom_call.1} parent=1 // pred_check
      _
    $region59: #{tpu_custom_call.1} parent=1 // pred_check_branch
      %77 = sbr.rel (0) target = $region61
    $region60: #{tpu_custom_call.1} parent=1 // pred_region
      %79 = vsyncadd [#allocation6], 0
      %s80 = sshll.u32 %s14, 4
      %s81 = int_to_ptr.hbm [resolvable:$true] %s80
      %s82 = sshll.u32 [#allocation7], 4
      %s83 = int_to_ptr.vmem [resolvable:$true] %s82
      %88 = dma.hbm_to_vmem [thread:$0]  %s81, 32, %s83, [#allocation6], 16, 16, 1
    $region61: #{tpu_custom_call.1} parent=1 // pred_fallthru
      _
    // Predicated region
    $region62: #{tpu_custom_call.1} parent=1 // pred_check
      _
    $region63: #{tpu_custom_call.1} parent=1 // pred_check_branch
      %90 = sbr.rel (0) target = $region65
    $region64: #{tpu_custom_call.1} parent=1 // pred_region
      _
    $region65: #{tpu_custom_call.1} parent=1 // pred_fallthru
      _
    // Predicated region
    $region66: #{tpu_custom_call.1} parent=1 // pred_check
      _
    $region67: #{tpu_custom_call.1} parent=1 // pred_check_branch
      %92 = sbr.rel (0) target = $region69
    $region68: #{tpu_custom_call.1} parent=1 // pred_region
      %94 = vsyncadd [#allocation9], 0
      %s95 = sshll.u32 %s16, 4
      %s96 = int_to_ptr.hbm [resolvable:$true] %s95
      %s97 = sshll.u32 [#allocation8], 4
      %s98 = int_to_ptr.vmem [resolvable:$true] %s97
      %103 = dma.hbm_to_vmem [thread:$0]  %s96, 512, %s98, [#allocation9], 128, 128, 8
    $region69: #{tpu_custom_call.1} parent=1 // pred_fallthru
      _
    // Predicated region
    $region70: #{tpu_custom_call.1} parent=1 // pred_check
      _
    $region71: #{tpu_custom_call.1} parent=1 // pred_check_branch
      %105 = sbr.rel (0) target = $region73
    $region72: #{tpu_custom_call.1} parent=1 // pred_region
      %107 = dma.done [#allocation3], 256
    $region73: #{tpu_custom_call.1} parent=1 // pred_fallthru
      _
    // Predicated region
    $region74: #{tpu_custom_call.1} parent=1 // pred_check
      _
    $region75: #{tpu_custom_call.1} parent=1 // pred_check_branch
      %109 = sbr.rel (0) target = $region77
    $region76: #{tpu_custom_call.1} parent=1 // pred_region
      %111 = dma.done [#allocation6], 256
    $region77: #{tpu_custom_call.1} parent=1 // pred_fallthru
      _
    // Predicated region
    $region78: #{tpu_custom_call.1} parent=1 // pred_check
      _
    $region79: #{tpu_custom_call.1} parent=1 // pred_check_branch
      %113 = sbr.rel (0) target = $region81
    $region80: #{tpu_custom_call.1} parent=1 // pred_region
      %115 = dma.done [#allocation6], 32
    $region81: #{tpu_custom_call.1} parent=1 // pred_fallthru
      _
    // Predicated region
    $region82: #{tpu_custom_call.1} parent=1 // pred_check
      _
    $region83: #{tpu_custom_call.1} parent=1 // pred_check_branch
      %117 = sbr.rel (0) target = $region85
    $region84: #{tpu_custom_call.1} parent=1 // pred_region
      %119 = dma.done [#allocation9], 512
    $region85: #{tpu_custom_call.1} parent=1 // pred_fallthru
      _
    %v120 = vld [vmem:[%s0] sm:$0xff]
    %v121 = vld [vmem:[%s0 + $0x8] sm:$0xff]
    %v122 = vlaneseq
    %v123 = vand.u32 %v122, 127
    %124 = vset.pattern.permute.xlu0 0
    %125 = vperm.xlu0 %124, %v120
    %v126 = vpop.permute.xlu0 %125
    %127 = vset.pattern.permute.xlu0 0
    %128 = vperm.xlu0 %127, %v121
    %v129 = vpop.permute.xlu0 %128
    %vm130 = vcmp.eq.s32.totalorder %v126, %v123
    %vm131 = vcmp.eq.s32.totalorder %v129, %v123
    %v132 = vsel %vm130, 1, 0
    %v133 = vsel %vm131, 1, 0
    %v134 = vcvt.s32.f32 %v132
    %v135 = vcvt.s32.f32 %v133
    %v136 = vld [vmem:[#allocation5] sm:$0xff]
    %v137 = vld [vmem:[#allocation5 + $0x8] sm:$0xff]
    %v138 = vld [vmem:[%s1] sm:$0xff]
    %v139 = vld [vmem:[%s1 + $0x8] sm:$0xff]
    %vm140 = vcmask 130048
    %v142 = vsel %vm140, %v134, 0
    %v145 = vsel %vm140, %v135, 0
    %147 = vmatpush.msra.mxu0 0.0
    %148 = vmatpush.msra.mxu0 0.0
    %149 = vmatpush.msra.mxu0 0.0
    %150 = vmatpush.msra.mxu0 0.0
    %151 = vmatpush.msra.mxu0 0.0
    %152 = vmatpush.msra.mxu0 0.0
    %153 = vmatpush.msra.mxu0 0.0
    %154 = vmatpush.msra.mxu0 0.0
    %155 = vmatpush.msra.mxu0 0.0
    %156 = vmatpush.msra.mxu0 0.0
    %157 = vmatpush.msra.mxu0 0.0
    %158 = vmatpush.msra.mxu0 0.0
    %159 = vmatpush.msra.mxu0 0.0
    %160 = vmatpush.msra.mxu0 0.0
    %161 = vmatpush.msra.mxu0 %v137
    %162 = vmatpush.msra.mxu0 %v136
    %163 = vmatmul.f32.gmra.mxu0 %v142
    %v164 = vpop.f32.mrf.mxu0
    %v165 = vadd.f32 %v138, %v164
    %166 = vmatmul.f32.gmra.mxu0 %v145
    %v167 = vpop.f32.mrf.mxu0
    %v168 = vadd.f32 %v139, %v167
    %169 = vdwg.mxu0
    %v170 = vld [vmem:[#allocation2] sm:$0xff]
    %v171 = vld [vmem:[#allocation2 + $0x8] sm:$0xff]
    %v172 = vld [vmem:[%s4] sm:$0xff]
    %v173 = vld [vmem:[%s4 + $0x8] sm:$0xff]
    %v174 = vld [vmem:[%s4 + $0x10] sm:$0xff]
    %v175 = vld [vmem:[%s4 + $0x18] sm:$0xff]
    %v176 = vld [vmem:[%s5] sm:$0x1]
    %v178 = vperm.slane %v176, 0
    %vm180 = vcmask 261120
    %v182 = vsel %vm180, %v165, 0
    %v185 = vsel %vm180, %v168, 0
    %187 = vmatpush.msra.mxu0 0.0
    %188 = vmatpush.msra.mxu0 0.0
    %189 = vmatpush.msra.mxu0 0.0
    %190 = vmatpush.msra.mxu0 0.0
    %191 = vmatpush.msra.mxu0 0.0
    %192 = vmatpush.msra.mxu0 0.0
    %193 = vmatpush.msra.mxu0 0.0
    %194 = vmatpush.msra.mxu0 0.0
    %195 = vmatpush.msra.mxu0 0.0
    %196 = vmatpush.msra.mxu0 0.0
    %197 = vmatpush.msra.mxu0 0.0
    %198 = vmatpush.msra.mxu0 0.0
    %199 = vmatpush.msra.mxu0 %v175
    %200 = vmatpush.msra.mxu0 %v174
    %201 = vmatpush.msra.mxu0 %v173
    %202 = vmatpush.msra.mxu0 %v172
    %203 = vmatmul.f32.gmra.mxu0 %v182
    %v204 = vpop.f32.mrf.mxu0
    %v205 = vadd.f32 %v178, %v204
    %206 = vmatmul.f32.gmra.mxu0 %v185
    %v207 = vpop.f32.mrf.mxu0
    %v208 = vadd.f32 %v178, %v207
    %209 = vdwg.mxu0
    %v210 = vld [vmem:[%s6] sm:$0xff]
    %v211 = vld [vmem:[%s6 + $0x8] sm:$0xff]
    %v212 = vld [vmem:[%s6 + $0x10] sm:$0xff]
    %v213 = vld [vmem:[%s6 + $0x18] sm:$0xff]
    %216 = vrot.lane.b32.xlu0 %v205, 96
    %v217 = vpop.permute.xlu0 %216
    %218 = vrot.lane.b32.xlu0 %v208, 96
    %v219 = vpop.permute.xlu0 %218
    %v220 = vsel %vm140, %v205, 0
    %v222 = vsel %vm140, %v208, 0
    %v224 = vsel %vm140, %v217, 0
    %v226 = vsel %vm140, %v219, 0
    %228 = vmatpush.xpose.msra.mxu0 0.0
    %229 = vmatpush.xpose.msra.mxu0 0.0
    %230 = vmatpush.xpose.msra.mxu0 0.0
    %231 = vmatpush.xpose.msra.mxu0 0.0
    %232 = vmatpush.xpose.msra.mxu0 0.0
    %233 = vmatpush.xpose.msra.mxu0 0.0
    %234 = vmatpush.xpose.msra.mxu0 0.0
    %235 = vmatpush.xpose.msra.mxu0 0.0
    %236 = vmatpush.xpose.msra.mxu0 0.0
    %237 = vmatpush.xpose.msra.mxu0 0.0
    %238 = vmatpush.xpose.msra.mxu0 0.0
    %239 = vmatpush.xpose.msra.mxu0 0.0
    %240 = vmatpush.xpose.msra.mxu0 0.0
    %241 = vmatpush.xpose.msra.mxu0 0.0
    %242 = vmatpush.xpose.msra.mxu0 %v226
    %243 = vmatpush.xpose.msra.mxu0 %v224
    %244 = vmatmul.f32.gmra.mxu0 %v220
    %v245 = vpop.f32.mrf.mxu0
    %v246 = vadd.f32 %v170, %v245
    %247 = vmatmul.f32.gmra.mxu0 %v222
    %v248 = vpop.f32.mrf.mxu0
    %v249 = vadd.f32 %v171, %v248
    %250 = vdwg.mxu0
    %v251 = vsel %vm140, %v246, -inf
    %252 = vmax.xlane.f32.xlu0 %v251
    %v253 = vpop.xlane.xlu0 %252
    %v254 = vsel %vm140, %v249, -inf
    %255 = vmax.xlane.f32.xlu0 %v254
    %v256 = vpop.xlane.xlu0 %255
    %v257 = vsub.f32 %v246, %v253
    %v258 = vsub.f32 %v249, %v256
    %v259 = vmul.f32 %v257, 1.442695
    %v260 = vpow.pop %v259
    %v261 = vmul.f32 %v258, 1.442695
    %v262 = vpow.pop %v261
    %v263 = vsel %vm140, %v260, 0.0
    %264 = vadd.xlane.f32.xlu0 %v263
    %v265 = vpop.xlane.xlu0 %264
    %v266 = vsel %vm140, %v262, 0.0
    %267 = vadd.xlane.f32.xlu0 %v266
    %v268 = vpop.xlane.xlu0 %267
    %v269 = vrcp.pop %v265
    %v270 = vrcp.pop %v268
    %v271 = vmul.f32 %v260, %v269
    %v272 = vmul.f32 %v262, %v270
    %273 = vrot.lane.b32.xlu0 %v205, 64
    %v274 = vpop.permute.xlu0 %273
    %275 = vrot.lane.b32.xlu0 %v208, 64
    %v276 = vpop.permute.xlu0 %275
    %v280 = vsel %vm140, %v271, 0
    %v283 = vsel %vm140, %v272, 0
    %285 = vmatpush.msra.mxu0 0.0
    %286 = vmatpush.msra.mxu0 0.0
    %287 = vmatpush.msra.mxu0 0.0
    %288 = vmatpush.msra.mxu0 0.0
    %289 = vmatpush.msra.mxu0 0.0
    %290 = vmatpush.msra.mxu0 0.0
    %291 = vmatpush.msra.mxu0 0.0
    %292 = vmatpush.msra.mxu0 0.0
    %293 = vmatpush.msra.mxu0 0.0
    %294 = vmatpush.msra.mxu0 0.0
    %295 = vmatpush.msra.mxu0 0.0
    %296 = vmatpush.msra.mxu0 0.0
    %297 = vmatpush.msra.mxu0 0.0
    %298 = vmatpush.msra.mxu0 0.0
    %299 = vmatpush.msra.mxu0 %v276
    %300 = vmatpush.msra.mxu0 %v274
    %301 = vmatmul.f32.gmra.mxu0 %v280
    %v302 = vpop.f32.mrf.mxu0
    %v303 = vadd.f32 0.0, %v302
    %304 = vmatmul.f32.gmra.mxu0 %v283
    %v305 = vpop.f32.mrf.mxu0
    %v306 = vadd.f32 0.0, %v305
    %307 = vdwg.mxu0
    %308 = vrot.lane.b32.xlu0 %v205, 112
    %v309 = vpop.permute.xlu0 %308
    %310 = vrot.lane.b32.xlu0 %v208, 112
    %v311 = vpop.permute.xlu0 %310
    %312 = vrot.lane.b32.xlu0 %v205, 80
    %v313 = vpop.permute.xlu0 %312
    %314 = vrot.lane.b32.xlu0 %v208, 80
    %v315 = vpop.permute.xlu0 %314
    %v316 = vsel %vm140, %v309, 0
    %v318 = vsel %vm140, %v311, 0
    %v320 = vsel %vm140, %v313, 0
    %v322 = vsel %vm140, %v315, 0
    %324 = vmatpush.xpose.msra.mxu0 0.0
    %325 = vmatpush.xpose.msra.mxu0 0.0
    %326 = vmatpush.xpose.msra.mxu0 0.0
    %327 = vmatpush.xpose.msra.mxu0 0.0
    %328 = vmatpush.xpose.msra.mxu0 0.0
    %329 = vmatpush.xpose.msra.mxu0 0.0
    %330 = vmatpush.xpose.msra.mxu0 0.0
    %331 = vmatpush.xpose.msra.mxu0 0.0
    %332 = vmatpush.xpose.msra.mxu0 0.0
    %333 = vmatpush.xpose.msra.mxu0 0.0
    %334 = vmatpush.xpose.msra.mxu0 0.0
    %335 = vmatpush.xpose.msra.mxu0 0.0
    %336 = vmatpush.xpose.msra.mxu0 0.0
    %337 = vmatpush.xpose.msra.mxu0 0.0
    %338 = vmatpush.xpose.msra.mxu0 %v322
    %339 = vmatpush.xpose.msra.mxu0 %v320
    %340 = vmatmul.f32.gmra.mxu0 %v316
    %v341 = vpop.f32.mrf.mxu0
    %v342 = vadd.f32 %v170, %v341
    %343 = vmatmul.f32.gmra.mxu0 %v318
    %v344 = vpop.f32.mrf.mxu0
    %v345 = vadd.f32 %v171, %v344
    %346 = vdwg.mxu0
    %v347 = vsel %vm140, %v342, -inf
    %348 = vmax.xlane.f32.xlu0 %v347
    %v349 = vpop.xlane.xlu0 %348
    %v350 = vsel %vm140, %v345, -inf
    %351 = vmax.xlane.f32.xlu0 %v350
    %v352 = vpop.xlane.xlu0 %351
    %v353 = vsub.f32 %v342, %v349
    %v354 = vsub.f32 %v345, %v352
    %v355 = vmul.f32 %v353, 1.442695
    %v356 = vpow.pop %v355
    %v357 = vmul.f32 %v354, 1.442695
    %v358 = vpow.pop %v357
    %v359 = vsel %vm140, %v356, 0.0
    %360 = vadd.xlane.f32.xlu0 %v359
    %v361 = vpop.xlane.xlu0 %360
    %v362 = vsel %vm140, %v358, 0.0
    %363 = vadd.xlane.f32.xlu0 %v362
    %v364 = vpop.xlane.xlu0 %363
    %v365 = vrcp.pop %v361
    %v366 = vrcp.pop %v364
    %v367 = vmul.f32 %v356, %v365
    %v368 = vmul.f32 %v358, %v366
    %369 = vrot.lane.b32.xlu0 %v205, 48
    %v370 = vpop.permute.xlu0 %369
    %371 = vrot.lane.b32.xlu0 %v208, 48
    %v372 = vpop.permute.xlu0 %371
    %v376 = vsel %vm140, %v367, 0
    %v379 = vsel %vm140, %v368, 0
    %381 = vmatpush.msra.mxu0 0.0
    %382 = vmatpush.msra.mxu0 0.0
    %383 = vmatpush.msra.mxu0 0.0
    %384 = vmatpush.msra.mxu0 0.0
    %385 = vmatpush.msra.mxu0 0.0
    %386 = vmatpush.msra.mxu0 0.0
    %387 = vmatpush.msra.mxu0 0.0
    %388 = vmatpush.msra.mxu0 0.0
    %389 = vmatpush.msra.mxu0 0.0
    %390 = vmatpush.msra.mxu0 0.0
    %391 = vmatpush.msra.mxu0 0.0
    %392 = vmatpush.msra.mxu0 0.0
    %393 = vmatpush.msra.mxu0 0.0
    %394 = vmatpush.msra.mxu0 0.0
    %395 = vmatpush.msra.mxu0 %v372
    %396 = vmatpush.msra.mxu0 %v370
    %397 = vmatmul.f32.gmra.mxu0 %v376
    %v398 = vpop.f32.mrf.mxu0
    %v399 = vadd.f32 0.0, %v398
    %400 = vmatmul.f32.gmra.mxu0 %v379
    %v401 = vpop.f32.mrf.mxu0
    %v402 = vadd.f32 0.0, %v401
    %403 = vdwg.mxu0
    %v405 = vsel %vm140, %v399, 0
    %v408 = vsel %vm140, %v402, 0
    %410 = vmatpush.msra.mxu0 0.0
    %411 = vmatpush.msra.mxu0 0.0
    %412 = vmatpush.msra.mxu0 0.0
    %413 = vmatpush.msra.mxu0 0.0
    %414 = vmatpush.msra.mxu0 0.0
    %415 = vmatpush.msra.mxu0 0.0
    %416 = vmatpush.msra.mxu0 0.0
    %417 = vmatpush.msra.mxu0 0.0
    %418 = vmatpush.msra.mxu0 0.0
    %419 = vmatpush.msra.mxu0 0.0
    %420 = vmatpush.msra.mxu0 0.0
    %421 = vmatpush.msra.mxu0 0.0
    %422 = vmatpush.msra.mxu0 0.0
    %423 = vmatpush.msra.mxu0 0.0
    %424 = vmatpush.msra.mxu0 %v213
    %425 = vmatpush.msra.mxu0 %v212
    %426 = vmatmul.f32.gmra.mxu0 %v405
    %v427 = vpop.f32.mrf.mxu0
    %v428 = vadd.f32 0.0, %v427
    %429 = vmatmul.f32.gmra.mxu0 %v408
    %v430 = vpop.f32.mrf.mxu0
    %v431 = vadd.f32 0.0, %v430
    %432 = vdwg.mxu0
    %v434 = vsel %vm140, %v303, 0
    %v437 = vsel %vm140, %v306, 0
    %439 = vmatpush.msra.mxu0 0.0
    %440 = vmatpush.msra.mxu0 0.0
    %441 = vmatpush.msra.mxu0 0.0
    %442 = vmatpush.msra.mxu0 0.0
    %443 = vmatpush.msra.mxu0 0.0
    %444 = vmatpush.msra.mxu0 0.0
    %445 = vmatpush.msra.mxu0 0.0
    %446 = vmatpush.msra.mxu0 0.0
    %447 = vmatpush.msra.mxu0 0.0
    %448 = vmatpush.msra.mxu0 0.0
    %449 = vmatpush.msra.mxu0 0.0
    %450 = vmatpush.msra.mxu0 0.0
    %451 = vmatpush.msra.mxu0 0.0
    %452 = vmatpush.msra.mxu0 0.0
    %453 = vmatpush.msra.mxu0 %v211
    %454 = vmatpush.msra.mxu0 %v210
    %455 = vmatmul.f32.gmra.mxu0 %v434
    %v456 = vpop.f32.mrf.mxu0
    %v457 = vadd.f32 %v428, %v456
    %458 = vmatmul.f32.gmra.mxu0 %v437
    %v459 = vpop.f32.mrf.mxu0
    %v460 = vadd.f32 %v431, %v459
    %461 = vdwg.mxu0
    %v462 = vadd.f32 %v165, %v457
    %v463 = vadd.f32 %v168, %v460
    %v464 = vld [vmem:[%s7] sm:$0x1]
    %v466 = vperm.slane %v464, 0
    %v468 = vadd.f32 %v462, %v466
    %v469 = vadd.f32 %v463, %v466
    %v470 = vld [vmem:[%s12] sm:$0x1]
    %v471 = vld [vmem:[%s13] sm:$0x1]
    %v472 = vsel %vm180, %v468, 0.0
    %473 = vadd.xlane.f32.xlu0 %v472
    %v474 = vpop.xlane.xlu0 %473
    %v475 = vsel %vm180, %v469, 0.0
    %476 = vadd.xlane.f32.xlu0 %v475
    %v477 = vpop.xlane.xlu0 %476
    %v478 = vrcp.pop 32.0
    %v479 = vmul.f32 32.0, %v478
    %v480 = vsub.f32 1.0, %v479
    %v481 = vmul.f32 %v478, %v480
    %v482 = vadd.f32 %v478, %v481
    %vm483 = vweird.f32 %v478
    %v484 = vsel %vm483, %v478, %v482
    %v485 = vmul.f32 %v474, %v484
    %v486 = vmul.f32 %v477, %v484
    %v487 = vsub.f32 %v468, %v485
    %v488 = vsub.f32 %v469, %v486
    %v489 = vmul.f32 %v487, %v487
    %v490 = vmul.f32 %v488, %v488
    %v491 = vsel %vm180, %v489, 0.0
    %492 = vadd.xlane.f32.xlu0 %v491
    %v493 = vpop.xlane.xlu0 %492
    %v494 = vsel %vm180, %v490, 0.0
    %495 = vadd.xlane.f32.xlu0 %v494
    %v496 = vpop.xlane.xlu0 %495
    %v497 = vmul.f32 %v493, %v484
    %v498 = vmul.f32 %v496, %v484
    %v499 = vadd.f32 %v497, 1e-05
    %v500 = vadd.f32 %v498, 1e-05
    %v501 = vrsqrt.pop %v499
    %v502 = vmul.f32 %v501, %v499
    %v503 = vmul.f32 %v502, %v501
    %v504 = vmul.f32 0.5, %v503
    %v505 = vsub.f32 1.5, %v504
    %v506 = vmul.f32 %v501, %v505
    %vm507 = vweird.f32 %v499
    %vm508 = vweird.f32 %v501
    %vm509 = vmor %vm507, %vm508
    %v510 = vsel %vm509, %v501, %v506
    %v511 = vrsqrt.pop %v500
    %v512 = vmul.f32 %v511, %v500
    %v513 = vmul.f32 %v512, %v511
    %v514 = vmul.f32 0.5, %v513
    %v515 = vsub.f32 1.5, %v514
    %v516 = vmul.f32 %v511, %v515
    %vm517 = vweird.f32 %v500
    %vm518 = vweird.f32 %v511
    %vm519 = vmor %vm517, %vm518
    %v520 = vsel %vm519, %v511, %v516
    %v521 = vmul.f32 %v487, %v510
    %v522 = vmul.f32 %v488, %v520
    %v524 = vperm.slane %v470, 0
    %v526 = vmul.f32 %v521, %v524
    %v527 = vmul.f32 %v522, %v524
    %v529 = vperm.slane %v471, 0
    %v531 = vadd.f32 %v526, %v529
    %v532 = vadd.f32 %v527, %v529
    %v533 = vld [vmem:[%s8] sm:$0xff]
    %v534 = vld [vmem:[%s8 + $0x8] sm:$0xff]
    %v535 = vld [vmem:[%s8 + $0x10] sm:$0xff]
    %v536 = vld [vmem:[%s8 + $0x18] sm:$0xff]
    %v537 = vld [vmem:[%s9] sm:$0x1]
    %v539 = vperm.slane %v537, 0
    %v542 = vsel %vm180, %v531, 0
    %v545 = vsel %vm180, %v532, 0
    %547 = vmatpush.msra.mxu0 0.0
    %548 = vmatpush.msra.mxu0 0.0
    %549 = vmatpush.msra.mxu0 0.0
    %550 = vmatpush.msra.mxu0 0.0
    %551 = vmatpush.msra.mxu0 0.0
    %552 = vmatpush.msra.mxu0 0.0
    %553 = vmatpush.msra.mxu0 0.0
    %554 = vmatpush.msra.mxu0 0.0
    %555 = vmatpush.msra.mxu0 0.0
    %556 = vmatpush.msra.mxu0 0.0
    %557 = vmatpush.msra.mxu0 0.0
    %558 = vmatpush.msra.mxu0 0.0
    %559 = vmatpush.msra.mxu0 %v536
    %560 = vmatpush.msra.mxu0 %v535
    %561 = vmatpush.msra.mxu0 %v534
    %562 = vmatpush.msra.mxu0 %v533
    %563 = vmatmul.f32.gmra.mxu0 %v542
    %v564 = vpop.f32.mrf.mxu0
    %v565 = vadd.f32 %v539, %v564
    %566 = vmatmul.f32.gmra.mxu0 %v545
    %v567 = vpop.f32.mrf.mxu0
    %v568 = vadd.f32 %v539, %v567
    %569 = vdwg.mxu0
    %v570 = vmax.f32 %v565, 0.0
    %v571 = vmax.f32 %v568, 0.0
    %v572 = vld [vmem:[%s10] sm:$0xff]
    %v573 = vld [vmem:[%s10 + $0x8] sm:$0xff]
    %v574 = vld [vmem:[%s10 + $0x10] sm:$0xff]
    %v575 = vld [vmem:[%s10 + $0x18] sm:$0xff]
    %v576 = vld [vmem:[%s10 + $0x20] sm:$0xff]
    %v577 = vld [vmem:[%s10 + $0x28] sm:$0xff]
    %v578 = vld [vmem:[%s10 + $0x30] sm:$0xff]
    %v579 = vld [vmem:[%s10 + $0x38] sm:$0xff]
    %v580 = vld [vmem:[%s11] sm:$0x1]
    %v582 = vperm.slane %v580, 0
    %vm584 = vcmask 523264
    %v586 = vsel %vm584, %v570, 0
    %v589 = vsel %vm584, %v571, 0
    %591 = vmatpush.msra.mxu0 0.0
    %592 = vmatpush.msra.mxu0 0.0
    %593 = vmatpush.msra.mxu0 0.0
    %594 = vmatpush.msra.mxu0 0.0
    %595 = vmatpush.msra.mxu0 0.0
    %596 = vmatpush.msra.mxu0 0.0
    %597 = vmatpush.msra.mxu0 0.0
    %598 = vmatpush.msra.mxu0 0.0
    %599 = vmatpush.msra.mxu0 %v579
    %600 = vmatpush.msra.mxu0 %v578
    %601 = vmatpush.msra.mxu0 %v577
    %602 = vmatpush.msra.mxu0 %v576
    %603 = vmatpush.msra.mxu0 %v575
    %604 = vmatpush.msra.mxu0 %v574
    %605 = vmatpush.msra.mxu0 %v573
    %606 = vmatpush.msra.mxu0 %v572
    %607 = vmatmul.f32.gmra.mxu0 %v586
    %v608 = vpop.f32.mrf.mxu0
    %v609 = vadd.f32 %v582, %v608
    %610 = vmatmul.f32.gmra.mxu0 %v589
    %v611 = vpop.f32.mrf.mxu0
    %v612 = vadd.f32 %v582, %v611
    %613 = vdwg.mxu0
    %v614 = vadd.f32 %v531, %v609
    %v615 = vadd.f32 %v532, %v612
    %v616 = vld [vmem:[#allocation7] sm:$0x1]
    %v617 = vld [vmem:[%s15] sm:$0x1]
    %v618 = vsel %vm180, %v614, 0.0
    %619 = vadd.xlane.f32.xlu0 %v618
    %v620 = vpop.xlane.xlu0 %619
    %v621 = vsel %vm180, %v615, 0.0
    %622 = vadd.xlane.f32.xlu0 %v621
    %v623 = vpop.xlane.xlu0 %622
    %v624 = vmul.f32 %v620, %v484
    %v625 = vmul.f32 %v623, %v484
    %v626 = vsub.f32 %v614, %v624
    %v627 = vsub.f32 %v615, %v625
    %v628 = vmul.f32 %v626, %v626
    %v629 = vmul.f32 %v627, %v627
    %v630 = vsel %vm180, %v628, 0.0
    %631 = vadd.xlane.f32.xlu0 %v630
    %v632 = vpop.xlane.xlu0 %631
    %v633 = vsel %vm180, %v629, 0.0
    %634 = vadd.xlane.f32.xlu0 %v633
    %v635 = vpop.xlane.xlu0 %634
    %v636 = vmul.f32 %v632, %v484
    %v637 = vmul.f32 %v635, %v484
    %v638 = vadd.f32 %v636, 1e-05
    %v639 = vadd.f32 %v637, 1e-05
    %v640 = vrsqrt.pop %v638
    %v641 = vmul.f32 %v640, %v638
    %v642 = vmul.f32 %v641, %v640
    %v643 = vmul.f32 0.5, %v642
    %v644 = vsub.f32 1.5, %v643
    %v645 = vmul.f32 %v640, %v644
    %vm646 = vweird.f32 %v638
    %vm647 = vweird.f32 %v640
    %vm648 = vmor %vm646, %vm647
    %v649 = vsel %vm648, %v640, %v645
    %v650 = vrsqrt.pop %v639
    %v651 = vmul.f32 %v650, %v639
    %v652 = vmul.f32 %v651, %v650
    %v653 = vmul.f32 0.5, %v652
    %v654 = vsub.f32 1.5, %v653
    %v655 = vmul.f32 %v650, %v654
    %vm656 = vweird.f32 %v639
    %vm657 = vweird.f32 %v650
    %vm658 = vmor %vm656, %vm657
    %v659 = vsel %vm658, %v650, %v655
    %v660 = vmul.f32 %v626, %v649
    %v661 = vmul.f32 %v627, %v659
    %v663 = vperm.slane %v616, 0
    %v665 = vmul.f32 %v660, %v663
    %v666 = vmul.f32 %v661, %v663
    %v668 = vperm.slane %v617, 0
    %v670 = vadd.f32 %v665, %v668
    %v671 = vadd.f32 %v666, %v668
    %s672 = scalar_lea.vmem %s4, 32
    %v673 = vld [vmem:[%s672] sm:$0xff]
    %v674 = vld [vmem:[%s672 + $0x8] sm:$0xff]
    %v675 = vld [vmem:[%s672 + $0x10] sm:$0xff]
    %v676 = vld [vmem:[%s672 + $0x18] sm:$0xff]
    %s677 = scalar_lea.vmem %s5, 1
    %v678 = vld [vmem:[%s677] sm:$0x1]
    %v680 = vperm.slane %v678, 0
    %v683 = vsel %vm180, %v670, 0
    %v686 = vsel %vm180, %v671, 0
    %688 = vmatpush.msra.mxu0 0.0
    %689 = vmatpush.msra.mxu0 0.0
    %690 = vmatpush.msra.mxu0 0.0
    %691 = vmatpush.msra.mxu0 0.0
    %692 = vmatpush.msra.mxu0 0.0
    %693 = vmatpush.msra.mxu0 0.0
    %694 = vmatpush.msra.mxu0 0.0
    %695 = vmatpush.msra.mxu0 0.0
    %696 = vmatpush.msra.mxu0 0.0
    %697 = vmatpush.msra.mxu0 0.0
    %698 = vmatpush.msra.mxu0 0.0
    %699 = vmatpush.msra.mxu0 0.0
    %700 = vmatpush.msra.mxu0 %v676
    %701 = vmatpush.msra.mxu0 %v675
    %702 = vmatpush.msra.mxu0 %v674
    %703 = vmatpush.msra.mxu0 %v673
    %704 = vmatmul.f32.gmra.mxu0 %v683
    %v705 = vpop.f32.mrf.mxu0
    %v706 = vadd.f32 %v680, %v705
    %707 = vmatmul.f32.gmra.mxu0 %v686
    %v708 = vpop.f32.mrf.mxu0
    %v709 = vadd.f32 %v680, %v708
    %710 = vdwg.mxu0
    %s711 = scalar_lea.vmem %s6, 32
    %v712 = vld [vmem:[%s711] sm:$0xff]
    %v713 = vld [vmem:[%s711 + $0x8] sm:$0xff]
    %v714 = vld [vmem:[%s711 + $0x10] sm:$0xff]
    %v715 = vld [vmem:[%s711 + $0x18] sm:$0xff]
    %718 = vrot.lane.b32.xlu0 %v706, 96
    %v719 = vpop.permute.xlu0 %718
    %720 = vrot.lane.b32.xlu0 %v709, 96
    %v721 = vpop.permute.xlu0 %720
    %v722 = vsel %vm140, %v706, 0
    %v724 = vsel %vm140, %v709, 0
    %v726 = vsel %vm140, %v719, 0
    %v728 = vsel %vm140, %v721, 0
    %730 = vmatpush.xpose.msra.mxu0 0.0
    %731 = vmatpush.xpose.msra.mxu0 0.0
    %732 = vmatpush.xpose.msra.mxu0 0.0
    %733 = vmatpush.xpose.msra.mxu0 0.0
    %734 = vmatpush.xpose.msra.mxu0 0.0
    %735 = vmatpush.xpose.msra.mxu0 0.0
    %736 = vmatpush.xpose.msra.mxu0 0.0
    %737 = vmatpush.xpose.msra.mxu0 0.0
    %738 = vmatpush.xpose.msra.mxu0 0.0
    %739 = vmatpush.xpose.msra.mxu0 0.0
    %740 = vmatpush.xpose.msra.mxu0 0.0
    %741 = vmatpush.xpose.msra.mxu0 0.0
    %742 = vmatpush.xpose.msra.mxu0 0.0
    %743 = vmatpush.xpose.msra.mxu0 0.0
    %744 = vmatpush.xpose.msra.mxu0 %v728
    %745 = vmatpush.xpose.msra.mxu0 %v726
    %746 = vmatmul.f32.gmra.mxu0 %v722
    %v747 = vpop.f32.mrf.mxu0
    %v748 = vadd.f32 %v170, %v747
    %749 = vmatmul.f32.gmra.mxu0 %v724
    %v750 = vpop.f32.mrf.mxu0
    %v751 = vadd.f32 %v171, %v750
    %752 = vdwg.mxu0
    %v753 = vsel %vm140, %v748, -inf
    %754 = vmax.xlane.f32.xlu0 %v753
    %v755 = vpop.xlane.xlu0 %754
    %v756 = vsel %vm140, %v751, -inf
    %757 = vmax.xlane.f32.xlu0 %v756
    %v758 = vpop.xlane.xlu0 %757
    %v759 = vsub.f32 %v748, %v755
    %v760 = vsub.f32 %v751, %v758
    %v761 = vmul.f32 %v759, 1.442695
    %v762 = vpow.pop %v761
    %v763 = vmul.f32 %v760, 1.442695
    %v764 = vpow.pop %v763
    %v765 = vsel %vm140, %v762, 0.0
    %766 = vadd.xlane.f32.xlu0 %v765
    %v767 = vpop.xlane.xlu0 %766
    %v768 = vsel %vm140, %v764, 0.0
    %769 = vadd.xlane.f32.xlu0 %v768
    %v770 = vpop.xlane.xlu0 %769
    %v771 = vrcp.pop %v767
    %v772 = vrcp.pop %v770
    %v773 = vmul.f32 %v762, %v771
    %v774 = vmul.f32 %v764, %v772
    %775 = vrot.lane.b32.xlu0 %v706, 64
    %v776 = vpop.permute.xlu0 %775
    %777 = vrot.lane.b32.xlu0 %v709, 64
    %v778 = vpop.permute.xlu0 %777
    %v782 = vsel %vm140, %v773, 0
    %v785 = vsel %vm140, %v774, 0
    %787 = vmatpush.msra.mxu0 0.0
    %788 = vmatpush.msra.mxu0 0.0
    %789 = vmatpush.msra.mxu0 0.0
    %790 = vmatpush.msra.mxu0 0.0
    %791 = vmatpush.msra.mxu0 0.0
    %792 = vmatpush.msra.mxu0 0.0
    %793 = vmatpush.msra.mxu0 0.0
    %794 = vmatpush.msra.mxu0 0.0
    %795 = vmatpush.msra.mxu0 0.0
    %796 = vmatpush.msra.mxu0 0.0
    %797 = vmatpush.msra.mxu0 0.0
    %798 = vmatpush.msra.mxu0 0.0
    %799 = vmatpush.msra.mxu0 0.0
    %800 = vmatpush.msra.mxu0 0.0
    %801 = vmatpush.msra.mxu0 %v778
    %802 = vmatpush.msra.mxu0 %v776
    %803 = vmatmul.f32.gmra.mxu0 %v782
    %v804 = vpop.f32.mrf.mxu0
    %v805 = vadd.f32 0.0, %v804
    %806 = vmatmul.f32.gmra.mxu0 %v785
    %v807 = vpop.f32.mrf.mxu0
    %v808 = vadd.f32 0.0, %v807
    %809 = vdwg.mxu0
    %810 = vrot.lane.b32.xlu0 %v706, 112
    %v811 = vpop.permute.xlu0 %810
    %812 = vrot.lane.b32.xlu0 %v709, 112
    %v813 = vpop.permute.xlu0 %812
    %814 = vrot.lane.b32.xlu0 %v706, 80
    %v815 = vpop.permute.xlu0 %814
    %816 = vrot.lane.b32.xlu0 %v709, 80
    %v817 = vpop.permute.xlu0 %816
    %v818 = vsel %vm140, %v811, 0
    %v820 = vsel %vm140, %v813, 0
    %v822 = vsel %vm140, %v815, 0
    %v824 = vsel %vm140, %v817, 0
    %826 = vmatpush.xpose.msra.mxu0 0.0
    %827 = vmatpush.xpose.msra.mxu0 0.0
    %828 = vmatpush.xpose.msra.mxu0 0.0
    %829 = vmatpush.xpose.msra.mxu0 0.0
    %830 = vmatpush.xpose.msra.mxu0 0.0
    %831 = vmatpush.xpose.msra.mxu0 0.0
    %832 = vmatpush.xpose.msra.mxu0 0.0
    %833 = vmatpush.xpose.msra.mxu0 0.0
    %834 = vmatpush.xpose.msra.mxu0 0.0
    %835 = vmatpush.xpose.msra.mxu0 0.0
    %836 = vmatpush.xpose.msra.mxu0 0.0
    %837 = vmatpush.xpose.msra.mxu0 0.0
    %838 = vmatpush.xpose.msra.mxu0 0.0
    %839 = vmatpush.xpose.msra.mxu0 0.0
    %840 = vmatpush.xpose.msra.mxu0 %v824
    %841 = vmatpush.xpose.msra.mxu0 %v822
    %842 = vmatmul.f32.gmra.mxu0 %v818
    %v843 = vpop.f32.mrf.mxu0
    %v844 = vadd.f32 %v170, %v843
    %845 = vmatmul.f32.gmra.mxu0 %v820
    %v846 = vpop.f32.mrf.mxu0
    %v847 = vadd.f32 %v171, %v846
    %848 = vdwg.mxu0
    %v849 = vsel %vm140, %v844, -inf
    %850 = vmax.xlane.f32.xlu0 %v849
    %v851 = vpop.xlane.xlu0 %850
    %v852 = vsel %vm140, %v847, -inf
    %853 = vmax.xlane.f32.xlu0 %v852
    %v854 = vpop.xlane.xlu0 %853
    %v855 = vsub.f32 %v844, %v851
    %v856 = vsub.f32 %v847, %v854
    %v857 = vmul.f32 %v855, 1.442695
    %v858 = vpow.pop %v857
    %v859 = vmul.f32 %v856, 1.442695
    %v860 = vpow.pop %v859
    %v861 = vsel %vm140, %v858, 0.0
    %862 = vadd.xlane.f32.xlu0 %v861
    %v863 = vpop.xlane.xlu0 %862
    %v864 = vsel %vm140, %v860, 0.0
    %865 = vadd.xlane.f32.xlu0 %v864
    %v866 = vpop.xlane.xlu0 %865
    %v867 = vrcp.pop %v863
    %v868 = vrcp.pop %v866
    %v869 = vmul.f32 %v858, %v867
    %v870 = vmul.f32 %v860, %v868
    %871 = vrot.lane.b32.xlu0 %v706, 48
    %v872 = vpop.permute.xlu0 %871
    %873 = vrot.lane.b32.xlu0 %v709, 48
    %v874 = vpop.permute.xlu0 %873
    %v878 = vsel %vm140, %v869, 0
    %v881 = vsel %vm140, %v870, 0
    %883 = vmatpush.msra.mxu0 0.0
    %884 = vmatpush.msra.mxu0 0.0
    %885 = vmatpush.msra.mxu0 0.0
    %886 = vmatpush.msra.mxu0 0.0
    %887 = vmatpush.msra.mxu0 0.0
    %888 = vmatpush.msra.mxu0 0.0
    %889 = vmatpush.msra.mxu0 0.0
    %890 = vmatpush.msra.mxu0 0.0
    %891 = vmatpush.msra.mxu0 0.0
    %892 = vmatpush.msra.mxu0 0.0
    %893 = vmatpush.msra.mxu0 0.0
    %894 = vmatpush.msra.mxu0 0.0
    %895 = vmatpush.msra.mxu0 0.0
    %896 = vmatpush.msra.mxu0 0.0
    %897 = vmatpush.msra.mxu0 %v874
    %898 = vmatpush.msra.mxu0 %v872
    %899 = vmatmul.f32.gmra.mxu0 %v878
    %v900 = vpop.f32.mrf.mxu0
    %v901 = vadd.f32 0.0, %v900
    %902 = vmatmul.f32.gmra.mxu0 %v881
    %v903 = vpop.f32.mrf.mxu0
    %v904 = vadd.f32 0.0, %v903
    %905 = vdwg.mxu0
    %v907 = vsel %vm140, %v901, 0
    %v910 = vsel %vm140, %v904, 0
    %912 = vmatpush.msra.mxu0 0.0
    %913 = vmatpush.msra.mxu0 0.0
    %914 = vmatpush.msra.mxu0 0.0
    %915 = vmatpush.msra.mxu0 0.0
    %916 = vmatpush.msra.mxu0 0.0
    %917 = vmatpush.msra.mxu0 0.0
    %918 = vmatpush.msra.mxu0 0.0
    %919 = vmatpush.msra.mxu0 0.0
    %920 = vmatpush.msra.mxu0 0.0
    %921 = vmatpush.msra.mxu0 0.0
    %922 = vmatpush.msra.mxu0 0.0
    %923 = vmatpush.msra.mxu0 0.0
    %924 = vmatpush.msra.mxu0 0.0
    %925 = vmatpush.msra.mxu0 0.0
    %926 = vmatpush.msra.mxu0 %v715
    %927 = vmatpush.msra.mxu0 %v714
    %928 = vmatmul.f32.gmra.mxu0 %v907
    %v929 = vpop.f32.mrf.mxu0
    %v930 = vadd.f32 0.0, %v929
    %931 = vmatmul.f32.gmra.mxu0 %v910
    %v932 = vpop.f32.mrf.mxu0
    %v933 = vadd.f32 0.0, %v932
    %934 = vdwg.mxu0
    %v936 = vsel %vm140, %v805, 0
    %v939 = vsel %vm140, %v808, 0
    %941 = vmatpush.msra.mxu0 0.0
    %942 = vmatpush.msra.mxu0 0.0
    %943 = vmatpush.msra.mxu0 0.0
    %944 = vmatpush.msra.mxu0 0.0
    %945 = vmatpush.msra.mxu0 0.0
    %946 = vmatpush.msra.mxu0 0.0
    %947 = vmatpush.msra.mxu0 0.0
    %948 = vmatpush.msra.mxu0 0.0
    %949 = vmatpush.msra.mxu0 0.0
    %950 = vmatpush.msra.mxu0 0.0
    %951 = vmatpush.msra.mxu0 0.0
    %952 = vmatpush.msra.mxu0 0.0
    %953 = vmatpush.msra.mxu0 0.0
    %954 = vmatpush.msra.mxu0 0.0
    %955 = vmatpush.msra.mxu0 %v713
    %956 = vmatpush.msra.mxu0 %v712
    %957 = vmatmul.f32.gmra.mxu0 %v936
    %v958 = vpop.f32.mrf.mxu0
    %v959 = vadd.f32 %v930, %v958
    %960 = vmatmul.f32.gmra.mxu0 %v939
    %v961 = vpop.f32.mrf.mxu0
    %v962 = vadd.f32 %v933, %v961
    %963 = vdwg.mxu0
    %v964 = vadd.f32 %v670, %v959
    %v965 = vadd.f32 %v671, %v962
    %s966 = scalar_lea.vmem %s7, 1
    %v967 = vld [vmem:[%s966] sm:$0x1]
    %v969 = vperm.slane %v967, 0
    %v971 = vadd.f32 %v964, %v969
    %v972 = vadd.f32 %v965, %v969
    %s973 = scalar_lea.vmem %s12, 1
    %v974 = vld [vmem:[%s973] sm:$0x1]
    %s975 = scalar_lea.vmem %s13, 1
    %v976 = vld [vmem:[%s975] sm:$0x1]
    %v977 = vsel %vm180, %v971, 0.0
    %978 = vadd.xlane.f32.xlu0 %v977
    %v979 = vpop.xlane.xlu0 %978
    %v980 = vsel %vm180, %v972, 0.0
    %981 = vadd.xlane.f32.xlu0 %v980
    %v982 = vpop.xlane.xlu0 %981
    %v983 = vmul.f32 %v979, %v484
    %v984 = vmul.f32 %v982, %v484
    %v985 = vsub.f32 %v971, %v983
    %v986 = vsub.f32 %v972, %v984
    %v987 = vmul.f32 %v985, %v985
    %v988 = vmul.f32 %v986, %v986
    %v989 = vsel %vm180, %v987, 0.0
    %990 = vadd.xlane.f32.xlu0 %v989
    %v991 = vpop.xlane.xlu0 %990
    %v992 = vsel %vm180, %v988, 0.0
    %993 = vadd.xlane.f32.xlu0 %v992
    %v994 = vpop.xlane.xlu0 %993
    %v995 = vmul.f32 %v991, %v484
    %v996 = vmul.f32 %v994, %v484
    %v997 = vadd.f32 %v995, 1e-05
    %v998 = vadd.f32 %v996, 1e-05
    %v999 = vrsqrt.pop %v997
    %v1000 = vmul.f32 %v999, %v997
    %v1001 = vmul.f32 %v1000, %v999
    %v1002 = vmul.f32 0.5, %v1001
    %v1003 = vsub.f32 1.5, %v1002
    %v1004 = vmul.f32 %v999, %v1003
    %vm1005 = vweird.f32 %v997
    %vm1006 = vweird.f32 %v999
    %vm1007 = vmor %vm1005, %vm1006
    %v1008 = vsel %vm1007, %v999, %v1004
    %v1009 = vrsqrt.pop %v998
    %v1010 = vmul.f32 %v1009, %v998
    %v1011 = vmul.f32 %v1010, %v1009
    %v1012 = vmul.f32 0.5, %v1011
    %v1013 = vsub.f32 1.5, %v1012
    %v1014 = vmul.f32 %v1009, %v1013
    %vm1015 = vweird.f32 %v998
    %vm1016 = vweird.f32 %v1009
    %vm1017 = vmor %vm1015, %vm1016
    %v1018 = vsel %vm1017, %v1009, %v1014
    %v1019 = vmul.f32 %v985, %v1008
    %v1020 = vmul.f32 %v986, %v1018
    %v1022 = vperm.slane %v974, 0
    %v1024 = vmul.f32 %v1019, %v1022
    %v1025 = vmul.f32 %v1020, %v1022
    %v1027 = vperm.slane %v976, 0
    %v1029 = vadd.f32 %v1024, %v1027
    %v1030 = vadd.f32 %v1025, %v1027
    %s1031 = scalar_lea.vmem %s8, 32
    %v1032 = vld [vmem:[%s1031] sm:$0xff]
    %v1033 = vld [vmem:[%s1031 + $0x8] sm:$0xff]
    %v1034 = vld [vmem:[%s1031 + $0x10] sm:$0xff]
    %v1035 = vld [vmem:[%s1031 + $0x18] sm:$0xff]
    %s1036 = scalar_lea.vmem %s9, 1
    %v1037 = vld [vmem:[%s1036] sm:$0x1]
    %v1039 = vperm.slane %v1037, 0
    %v1042 = vsel %vm180, %v1029, 0
    %v1045 = vsel %vm180, %v1030, 0
    %1047 = vmatpush.msra.mxu0 0.0
    %1048 = vmatpush.msra.mxu0 0.0
    %1049 = vmatpush.msra.mxu0 0.0
    %1050 = vmatpush.msra.mxu0 0.0
    %1051 = vmatpush.msra.mxu0 0.0
    %1052 = vmatpush.msra.mxu0 0.0
    %1053 = vmatpush.msra.mxu0 0.0
    %1054 = vmatpush.msra.mxu0 0.0
    %1055 = vmatpush.msra.mxu0 0.0
    %1056 = vmatpush.msra.mxu0 0.0
    %1057 = vmatpush.msra.mxu0 0.0
    %1058 = vmatpush.msra.mxu0 0.0
    %1059 = vmatpush.msra.mxu0 %v1035
    %1060 = vmatpush.msra.mxu0 %v1034
    %1061 = vmatpush.msra.mxu0 %v1033
    %1062 = vmatpush.msra.mxu0 %v1032
    %1063 = vmatmul.f32.gmra.mxu0 %v1042
    %v1064 = vpop.f32.mrf.mxu0
    %v1065 = vadd.f32 %v1039, %v1064
    %1066 = vmatmul.f32.gmra.mxu0 %v1045
    %v1067 = vpop.f32.mrf.mxu0
    %v1068 = vadd.f32 %v1039, %v1067
    %1069 = vdwg.mxu0
    %v1070 = vmax.f32 %v1065, 0.0
    %v1071 = vmax.f32 %v1068, 0.0
    %s1072 = scalar_lea.vmem %s10, 64
    %v1073 = vld [vmem:[%s1072] sm:$0xff]
    %v1074 = vld [vmem:[%s1072 + $0x8] sm:$0xff]
    %v1075 = vld [vmem:[%s1072 + $0x10] sm:$0xff]
    %v1076 = vld [vmem:[%s1072 + $0x18] sm:$0xff]
    %v1077 = vld [vmem:[%s1072 + $0x20] sm:$0xff]
    %v1078 = vld [vmem:[%s1072 + $0x28] sm:$0xff]
    %v1079 = vld [vmem:[%s1072 + $0x30] sm:$0xff]
    %v1080 = vld [vmem:[%s1072 + $0x38] sm:$0xff]
    %s1081 = scalar_lea.vmem %s11, 1
    %v1082 = vld [vmem:[%s1081] sm:$0x1]
    %v1084 = vperm.slane %v1082, 0
    %v1087 = vsel %vm584, %v1070, 0
    %v1090 = vsel %vm584, %v1071, 0
    %1092 = vmatpush.msra.mxu0 0.0
    %1093 = vmatpush.msra.mxu0 0.0
    %1094 = vmatpush.msra.mxu0 0.0
    %1095 = vmatpush.msra.mxu0 0.0
    %1096 = vmatpush.msra.mxu0 0.0
    %1097 = vmatpush.msra.mxu0 0.0
    %1098 = vmatpush.msra.mxu0 0.0
    %1099 = vmatpush.msra.mxu0 0.0
    %1100 = vmatpush.msra.mxu0 %v1080
    %1101 = vmatpush.msra.mxu0 %v1079
    %1102 = vmatpush.msra.mxu0 %v1078
    %1103 = vmatpush.msra.mxu0 %v1077
    %1104 = vmatpush.msra.mxu0 %v1076
    %1105 = vmatpush.msra.mxu0 %v1075
    %1106 = vmatpush.msra.mxu0 %v1074
    %1107 = vmatpush.msra.mxu0 %v1073
    %1108 = vmatmul.f32.gmra.mxu0 %v1087
    %v1109 = vpop.f32.mrf.mxu0
    %v1110 = vadd.f32 %v1084, %v1109
    %1111 = vmatmul.f32.gmra.mxu0 %v1090
    %v1112 = vpop.f32.mrf.mxu0
    %v1113 = vadd.f32 %v1084, %v1112
    %1114 = vdwg.mxu0
    %v1115 = vadd.f32 %v1029, %v1110
    %v1116 = vadd.f32 %v1030, %v1113
    %s1117 = scalar_lea.vmem [#allocation7], 1
    %v1118 = vld [vmem:[%s1117] sm:$0x1]
    %s1119 = scalar_lea.vmem %s15, 1
    %v1120 = vld [vmem:[%s1119] sm:$0x1]
    %v1121 = vsel %vm180, %v1115, 0.0
    %1122 = vadd.xlane.f32.xlu0 %v1121
    %v1123 = vpop.xlane.xlu0 %1122
    %v1124 = vsel %vm180, %v1116, 0.0
    %1125 = vadd.xlane.f32.xlu0 %v1124
    %v1126 = vpop.xlane.xlu0 %1125
    %v1127 = vmul.f32 %v1123, %v484
    %v1128 = vmul.f32 %v1126, %v484
    %v1129 = vsub.f32 %v1115, %v1127
    %v1130 = vsub.f32 %v1116, %v1128
    %v1131 = vmul.f32 %v1129, %v1129
    %v1132 = vmul.f32 %v1130, %v1130
    %v1133 = vsel %vm180, %v1131, 0.0
    %1134 = vadd.xlane.f32.xlu0 %v1133
    %v1135 = vpop.xlane.xlu0 %1134
    %v1136 = vsel %vm180, %v1132, 0.0
    %1137 = vadd.xlane.f32.xlu0 %v1136
    %v1138 = vpop.xlane.xlu0 %1137
    %v1139 = vmul.f32 %v1135, %v484
    %v1140 = vmul.f32 %v1138, %v484
    %v1141 = vadd.f32 %v1139, 1e-05
    %v1142 = vadd.f32 %v1140, 1e-05
    %v1143 = vrsqrt.pop %v1141
    %v1144 = vmul.f32 %v1143, %v1141
    %v1145 = vmul.f32 %v1144, %v1143
    %v1146 = vmul.f32 0.5, %v1145
    %v1147 = vsub.f32 1.5, %v1146
    %v1148 = vmul.f32 %v1143, %v1147
    %vm1149 = vweird.f32 %v1141
    %vm1150 = vweird.f32 %v1143
    %vm1151 = vmor %vm1149, %vm1150
    %v1152 = vsel %vm1151, %v1143, %v1148
    %v1153 = vrsqrt.pop %v1142
    %v1154 = vmul.f32 %v1153, %v1142
    %v1155 = vmul.f32 %v1154, %v1153
    %v1156 = vmul.f32 0.5, %v1155
    %v1157 = vsub.f32 1.5, %v1156
    %v1158 = vmul.f32 %v1153, %v1157
    %vm1159 = vweird.f32 %v1142
    %vm1160 = vweird.f32 %v1153
    %vm1161 = vmor %vm1159, %vm1160
    %v1162 = vsel %vm1161, %v1153, %v1158
    %v1163 = vmul.f32 %v1129, %v1152
    %v1164 = vmul.f32 %v1130, %v1162
    %v1166 = vperm.slane %v1118, 0
    %v1168 = vmul.f32 %v1163, %v1166
    %v1169 = vmul.f32 %v1164, %v1166
    %v1171 = vperm.slane %v1120, 0
    %v1173 = vadd.f32 %v1168, %v1171
    %v1174 = vadd.f32 %v1169, %v1171
    %v1175 = vld [vmem:[#allocation8] sm:$0xff]
    %v1176 = vld [vmem:[#allocation8 + $0x8] sm:$0xff]
    %v1177 = vld [vmem:[#allocation8 + $0x10] sm:$0xff]
    %v1178 = vld [vmem:[#allocation8 + $0x18] sm:$0xff]
    %v1180 = vsel %vm180, %v1173, 0
    %v1183 = vsel %vm180, %v1174, 0
    %1185 = vmatpush.msra.mxu0 0.0
    %1186 = vmatpush.msra.mxu0 0.0
    %1187 = vmatpush.msra.mxu0 0.0
    %1188 = vmatpush.msra.mxu0 0.0
    %1189 = vmatpush.msra.mxu0 0.0
    %1190 = vmatpush.msra.mxu0 0.0
    %1191 = vmatpush.msra.mxu0 0.0
    %1192 = vmatpush.msra.mxu0 0.0
    %1193 = vmatpush.msra.mxu0 0.0
    %1194 = vmatpush.msra.mxu0 0.0
    %1195 = vmatpush.msra.mxu0 0.0
    %1196 = vmatpush.msra.mxu0 0.0
    %1197 = vmatpush.msra.mxu0 %v1178
    %1198 = vmatpush.msra.mxu0 %v1177
    %1199 = vmatpush.msra.mxu0 %v1176
    %1200 = vmatpush.msra.mxu0 %v1175
    %1201 = vmatmul.f32.gmra.mxu0 %v1180
    %v1202 = vpop.f32.mrf.mxu0
    %v1203 = vadd.f32 0.0, %v1202
    %1204 = vmatmul.f32.gmra.mxu0 %v1183
    %v1205 = vpop.f32.mrf.mxu0
    %v1206 = vadd.f32 0.0, %v1205
    %1207 = vdwg.mxu0
    %v1208 = vsub.f32 0.0, %v1203
    %v1209 = vsub.f32 0.0, %v1206
    %v1210 = vmul.f32 %v1208, 1.442695
    %v1211 = vpow.pop %v1210
    %v1212 = vmul.f32 %v1209, 1.442695
    %v1213 = vpow.pop %v1212
    %v1214 = vadd.f32 %v1211, 1.0
    %v1215 = vadd.f32 %v1213, 1.0
    %v1216 = vrcp.pop %v1214
    %v1217 = vmul.f32 %v1214, %v1216
    %v1218 = vsub.f32 1.0, %v1217
    %v1219 = vmul.f32 %v1216, %v1218
    %v1220 = vadd.f32 %v1216, %v1219
    %vm1221 = vweird.f32 %v1214
    %vm1222 = vweird.f32 %v1216
    %vm1223 = vmor %vm1221, %vm1222
    %v1224 = vsel %vm1223, %v1216, %v1220
    %v1225 = vand.u32 2147483647, %v1214
    %vm1226 = vcmp.eq.f32.partialorder %v1225, 8.507059e+37
    %v1227 = vand.u32 %v1214, 2147483648
    %v1228 = vor.u32 1.1754944e-38, %v1227
    %v1229 = vsel %vm1226, %v1228, %v1224
    %v1230 = vmul.f32 1.0, %v1229
    %v1231 = vrcp.pop %v1215
    %v1232 = vmul.f32 %v1215, %v1231
    %v1233 = vsub.f32 1.0, %v1232
    %v1234 = vmul.f32 %v1231, %v1233
    %v1235 = vadd.f32 %v1231, %v1234
    %vm1236 = vweird.f32 %v1215
    %vm1237 = vweird.f32 %v1231
    %vm1238 = vmor %vm1236, %vm1237
    %v1239 = vsel %vm1238, %v1231, %v1235
    %v1240 = vand.u32 2147483647, %v1215
    %vm1241 = vcmp.eq.f32.partialorder %v1240, 8.507059e+37
    %v1242 = vand.u32 %v1215, 2147483648
    %v1243 = vor.u32 1.1754944e-38, %v1242
    %v1244 = vsel %vm1241, %v1243, %v1239
    %v1245 = vmul.f32 1.0, %v1244
    %1246 = vst [vmem:[#allocation10] sm:$0xff] %v1230
    %1247 = vst [vmem:[#allocation10 + $0x8] sm:$0xff] %v1245
    // Predicated region
    $region86: #{tpu_custom_call.1} parent=1 // pred_check
      _
    $region87: #{tpu_custom_call.1} parent=1 // pred_check_branch
      %1249 = sbr.rel (0) target = $region89
    $region88: #{tpu_custom_call.1} parent=1 // pred_region
      %1251 = vsyncadd [#allocation4], 0
      %s1252 = sshll.u32 [#allocation10], 4
      %s1253 = int_to_ptr.vmem [resolvable:$true] %s1252
      %s1254 = sshll.u32 %s17, 4
      %s1255 = int_to_ptr.hbm [resolvable:$true] %s1254
      %1260 = dma.vmem_to_hbm [thread:$0]  %s1253, 256, %s1255, [#allocation4], 128, 128, 8
    $region89: #{tpu_custom_call.1} parent=1 // pred_fallthru
      _
    // Predicated region
    $region90: #{tpu_custom_call.1} parent=1 // pred_check
      _
    $region91: #{tpu_custom_call.1} parent=1 // pred_check_branch
      %1262 = sbr.rel (0) target = $region93
    $region92: #{tpu_custom_call.1} parent=1 // pred_region
      %1264 = dma.done [#allocation4], 256
    $region93: #{tpu_custom_call.1} parent=1 // pred_fallthru
      _
    %1265 = vsyncpa [#allocation3], 1
    %1266 = vsyncpa [#allocation6], 1
    %1267 = vsyncpa [#allocation9], 1
    %1268 = vsyncpa [#allocation4], 1

</llo_original>
